<compile_context>
chip_gen: v5e
topology: v5e:2x2
jax: 0.10.0
libtpu: 0.0.40
codegen_flags: <defaults>
</compile_context>

<pallas_src>
import functools

import jax
import jax.numpy as jnp
import numpy as np
from jax import lax
from jax.experimental import pallas as pl
from jax.experimental.pallas import tpu as pltpu


def _convt_bnstats_kernel(x_ref, w_ref, y_ref, sum_ref, ssq_ref,
                          *, th, W, Cin, Cp, SB):
    """One (image, row-tile) step of ConvTranspose2d(4,2,1) + BN partial sums.

    x_ref   : (1, th+2, W+2, Cin) bf16  padded NHWC input window (1-px halo)
    w_ref   : (4, 4, Cin, Cp)     bf16  weight columns, [parity, tap]
    y_ref   : (4, 1, th*W, Cp)    bf16  conv output rows for each parity
    sum_ref : (1, SB, Cp)         f32   per-step BN partial sum   (VALU only)
    ssq_ref : (1, SB, Cp)         f32   per-step BN partial sum-sq
    """
    s_acc = jnp.zeros((SB, Cp), jnp.float32)
    q_acc = jnp.zeros((SB, Cp), jnp.float32)
    for ph in (0, 1):
        for pw in (0, 1):
            p = 2 * ph + pw
            acc = jnp.zeros((th * W, Cp), jnp.float32)
            # Output pixel (2i+ph, 2j+pw) pulls input (i+ph+a-1, j+pw+b-1)
            # through kernel tap (kh, kw) = (3-ph-2a, 3-pw-2b); the window
            # row/col slice start is (ph+a, pw+b).
            for a in (0, 1):
                for b in (0, 1):
                    t = 2 * a + b
                    patch = x_ref[0, ph + a:ph + a + th, pw + b:pw + b + W, :]
                    acc = acc + jnp.dot(patch.reshape(th * W, Cin), w_ref[p, t],
                                        preferred_element_type=jnp.float32)
            y_ref[p, 0] = acc.astype(y_ref.dtype)
            # (SB, Cp)-shaped partials: pure vreg adds, no per-step XLU reduce.
            s_acc = s_acc + jnp.sum(acc.reshape(-1, SB, Cp), axis=0)
            q_acc = q_acc + jnp.sum((acc * acc).reshape(-1, SB, Cp), axis=0)
    sum_ref[0] = s_acc
    ssq_ref[0] = q_acc


def _vmem_budgets():
    """(vmem_limit_bytes, per-step tile budget); generation-aware, v7x-safe."""
    phys = 64 * 1024 * 1024                     # assume smallest (v7x) if unknown
    try:
        phys = int(getattr(pltpu.get_tpu_info(), "vmem_capacity_bytes", phys))
    except Exception:
        pass
    limit = min((phys * 3) // 4, 100 * 1024 * 1024)   # 48 MiB v7x, 96 MiB v5e/v6e
    return limit, max(limit // 2, 16 * 1024 * 1024)


def _pick_row_tile(H, W, Cin, Cp, budget):
    """Largest divisor of H whose per-step buffers fit the VMEM budget."""
    cands = [d for d in range(H, 0, -1)
             if H % d == 0 and (d == H or (d * W) % 8 == 0)]

    def step_bytes(th):
        xh = 2 * (th + 2) * (W + 2) * Cin * 2         # input window, double-buffered
        wb = 2 * 16 * Cin * Cp * 2                    # resident weights
        yb = 2 * 4 * th * W * Cp * 2                  # conv output, double-buffered
        sc = 2 * th * W * Cp * 4 + 2 * th * W * Cin * 2   # f32 acc + patch temps
        return xh + wb + yb + sc + (1 << 20)

    for th in cands:
        if step_bytes(th) <= budget:
            return th
    return cands[-1]   # smallest legal tile; only exceeds budget for extreme shapes


def unet_up_forward(x_nchw, skip_nchw, weight, gamma, beta, eps=1e-5):
    N, Cin, H, W = x_nchw.shape
    Cin_w, Cout, KH, KW = weight.shape
    assert (Cin_w, KH, KW) == (Cin, 4, 4)

    # Lane-dense channel padding only when cheap (<= 2x); sliced off before the
    # layout transpose so dead channels never reach the expensive passes.
    Cp_aligned = ((Cout + 127) // 128) * 128
    Cp = Cp_aligned if Cp_aligned <= 2 * Cout else Cout
    w_p = weight if Cp == Cout else jnp.pad(
        weight, ((0, 0), (0, Cp - Cout), (0, 0), (0, 0)))

    # Per-(parity, tap) weight columns, matching the kernel's slice ordering.
    w_taps = []
    for ph in (0, 1):
        for pw in (0, 1):
            taps = [w_p[:, :, 3 - ph - 2 * a, 3 - pw - 2 * b]
                    for a in (0, 1) for b in (0, 1)]               # each (Cin, Cp)
            w_taps.append(jnp.stack(taps, axis=0))                  # (4, Cin, Cp)
    w_all = jnp.stack(w_taps, axis=0).astype(jnp.bfloat16)          # (4, 4, Cin, Cp)

    # Padded NHWC bf16 input -- one fused XLA pass, no shifted copies.
    x = jnp.transpose(x_nchw, (0, 2, 3, 1)).astype(jnp.bfloat16)    # (N, H, W, Cin)
    xp = jnp.pad(x, ((0, 0), (1, 1), (1, 1), (0, 0)))               # (N, H+2, W+2, Cin)

    vmem_limit, budget = _vmem_budgets()
    th = _pick_row_tile(H, W, Cin, Cp, budget)
    n_t = H // th
    if n_t == 1:
        xh = xp                                                     # zero duplication
    else:
        # Overlapping row windows (1-row halo each side): duplication (th+2)/th.
        xh = jnp.stack([xp[:, t * th:t * th + th + 2] for t in range(n_t)],
                       axis=1).reshape(N * n_t, th + 2, W + 2, Cin)

    SB = 8 if (th * W) % 8 == 0 else 1
    steps = N * n_t

    kernel = functools.partial(_convt_bnstats_kernel,
                               th=th, W=W, Cin=Cin, Cp=Cp, SB=SB)

    # TODO(synk): sweep pipeline_mode=pl.Buffered(3) on the xh input once measured.
    y_all, psum, pssq = pl.pallas_call(
        kernel,
        out_shape=(
            jax.ShapeDtypeStruct((4, steps, th * W, Cp), jnp.bfloat16),
            jax.ShapeDtypeStruct((steps, SB, Cp), jnp.float32),
            jax.ShapeDtypeStruct((steps, SB, Cp), jnp.float32),
        ),
        grid=(steps,),
        in_specs=[
            pl.BlockSpec((1, th + 2, W + 2, Cin), lambda s: (s, 0, 0, 0)),
            pl.BlockSpec((4, 4, Cin, Cp), lambda s: (0, 0, 0, 0)),
        ],
        out_specs=(
            pl.BlockSpec((4, 1, th * W, Cp), lambda s: (0, s, 0, 0)),
            pl.BlockSpec((1, SB, Cp), lambda s: (s, 0, 0)),
            pl.BlockSpec((1, SB, Cp), lambda s: (s, 0, 0)),
        ),
        compiler_params=pltpu.CompilerParams(
            dimension_semantics=("parallel",),
            vmem_limit_bytes=vmem_limit),
    )(xh, w_all)

    # BatchNorm2d (training-mode batch stats, biased variance) -- tiny reduce.
    count = jnp.float32(4 * N * H * W)                   # = N * (2H) * (2W)
    ysum = jnp.sum(psum, axis=(0, 1))[:Cout]
    yssq = jnp.sum(pssq, axis=(0, 1))[:Cout]
    mean = ysum / count
    var = jnp.maximum(yssq / count - mean * mean, 0.0)
    inv_std = lax.rsqrt(var + eps)
    scale = gamma.astype(jnp.float32) * inv_std
    shift = beta.astype(jnp.float32) - mean * scale

    # BN + ReLU + parity interleave + NHWC->NCHW: one fused XLA elementwise+transpose.
    y = y_all[..., :Cout].astype(jnp.float32)            # drop pad channels first
    y = jnp.maximum(y * scale + shift, 0.0).astype(skip_nchw.dtype)
    y6 = y.reshape(2, 2, N, H, W, Cout)                  # (ph, pw, n, i, j, c)
    y_nchw = jnp.transpose(y6, (2, 5, 3, 0, 4, 1)).reshape(N, Cout, 2 * H, 2 * W)

    # TODO(synk): final channel concat is a plain XLA copy; could be removed by
    # writing y directly into an aliased output slab alongside skip.
    return jnp.concatenate([y_nchw, skip_nchw], axis=1)


def _reference(x, skip, weight, gamma, beta, eps=1e-5):
    """Pure-JAX f32 reference via the dilated-conv equivalence of ConvTranspose2d."""
    w_flip = jnp.transpose(weight, (1, 0, 2, 3))[:, :, ::-1, ::-1]   # (Cout,Cin,4,4)
    y = jax.lax.conv_general_dilated(
        x.astype(jnp.float32), w_flip.astype(jnp.float32),
        window_strides=(1, 1), padding=[(2, 2), (2, 2)],
        lhs_dilation=(2, 2), dimension_numbers=("NCHW", "OIHW", "NCHW"),
        precision=jax.lax.Precision.HIGHEST)
    mean = jnp.mean(y, axis=(0, 2, 3), keepdims=True)
    var = jnp.mean((y - mean) ** 2, axis=(0, 2, 3), keepdims=True)
    yn = (y - mean) / jnp.sqrt(var + eps) * gamma[None, :, None, None] \
        + beta[None, :, None, None]
    return jnp.concatenate([jnp.maximum(yn, 0.0), skip.astype(jnp.float32)], axis=1)


if __name__ == "__main__":
    key = jax.random.PRNGKey(0)
    k1, k2, k3 = jax.random.split(key, 3)

    N, Cin, Cout, H, W = 2, 8, 8, 8, 8
    x = jax.random.normal(k1, (N, Cin, H, W), dtype=jnp.float32)
    skip = jax.random.normal(k2, (N, Cout, 2 * H, 2 * W), dtype=jnp.float32)
    # ConvTranspose2d weight layout is (Cin, Cout, 4, 4); BN gamma/beta at init.
    weight = 0.02 * jax.random.normal(k3, (Cin, Cout, 4, 4), dtype=jnp.float32)
    gamma = jnp.ones((Cout,), jnp.float32)
    beta = jnp.zeros((Cout,), jnp.float32)

    fwd = jax.jit(unet_up_forward)
    out = jax.block_until_ready(fwd(x, skip, weight, gamma, beta))
    ref = jax.block_until_ready(_reference(x, skip, weight, gamma, beta))

    assert out.shape == (N, 2 * Cout, 2 * H, 2 * W)
    if not np.allclose(np.asarray(out), np.asarray(ref), atol=5e-2, rtol=5e-2):
        raise AssertionError("Pallas UNetUp output mismatch vs reference")
    print("KERNEL_OK")
</pallas_src>

<mosaic_0001>
module attributes {stable_mosaic.version = 11 : i64} {
  func.func @_convt_bnstats_kernel(%arg0: i32, %arg1: memref<1x10x10x8xbf16, #tpu.memory_space<vmem>>, %arg2: memref<4x4x8x8xbf16, #tpu.memory_space<vmem>>, %arg3: memref<4x1x64x8xbf16, #tpu.memory_space<vmem>>, %arg4: memref<1x8x8xf32, #tpu.memory_space<vmem>>, %arg5: memref<1x8x8xf32, #tpu.memory_space<vmem>>) attributes {dimension_semantics = [#tpu.dimension_semantics<parallel>], iteration_bounds = array<i64: 2>, scalar_prefetch = 0 : i64, scratch_operands = 0 : i64, tpu.core_type = #tpu.core_type<tc>, window_params = [{transform_indices = @transform_0, window_bounds = array<i64: 1, 10, 10, 8>}, {pipeline_mode = #tpu.pipeline_mode<synchronous>, transform_indices = @transform_1, window_bounds = array<i64: 4, 4, 8, 8>}, {transform_indices = @transform_2, window_bounds = array<i64: 4, 1, 64, 8>}, {transform_indices = @transform_3, window_bounds = array<i64: 1, 8, 8>}, {transform_indices = @transform_4, window_bounds = array<i64: 1, 8, 8>}]} {
    %cst = arith.constant 0.000000e+00 : f32
    %0 = vector.broadcast %cst : f32 to vector<8x8xf32>
    %cst_0 = arith.constant 0.000000e+00 : f32
    %1 = vector.broadcast %cst_0 : f32 to vector<8x8xf32>
    %cst_1 = arith.constant 0.000000e+00 : f32
    %2 = vector.broadcast %cst_1 : f32 to vector<64x8xf32>
    %c0 = arith.constant 0 : index
    %c0_2 = arith.constant 0 : index
    %c0_3 = arith.constant 0 : index
    %c0_4 = arith.constant 0 : index
    %3 = vector.load %arg1[%c0, %c0_2, %c0_3, %c0_4] : memref<1x10x10x8xbf16, #tpu.memory_space<vmem>>, vector<1x8x8x8xbf16>
    %4 = vector.shape_cast %3 : vector<1x8x8x8xbf16> to vector<8x8x8xbf16>
    %5 = vector.shape_cast %4 : vector<8x8x8xbf16> to vector<64x8xbf16>
    %c0_5 = arith.constant 0 : index
    %c0_6 = arith.constant 0 : index
    %c0_7 = arith.constant 0 : index
    %c0_8 = arith.constant 0 : index
    %6 = vector.load %arg2[%c0_5, %c0_6, %c0_7, %c0_8] : memref<4x4x8x8xbf16, #tpu.memory_space<vmem>>, vector<1x1x8x8xbf16>
    %7 = vector.shape_cast %6 : vector<1x1x8x8xbf16> to vector<8x8xbf16>
    %cst_9 = arith.constant dense<0.000000e+00> : vector<64x8xf32>
    %8 = tpu.matmul %5, %7, %cst_9 {dimension_numbers = #tpu.dot_dimension_numbers<[1], [0], [0], [1], [0, 0, 1, 1], [], []>} : vector<64x8xbf16>, vector<8x8xbf16>, vector<64x8xf32> -> vector<64x8xf32>
    %9 = arith.addf %2, %8 : vector<64x8xf32>
    %c0_10 = arith.constant 0 : index
    %c0_11 = arith.constant 0 : index
    %c1 = arith.constant 1 : index
    %c0_12 = arith.constant 0 : index
    %10 = vector.load %arg1[%c0_10, %c0_11, %c1, %c0_12] : memref<1x10x10x8xbf16, #tpu.memory_space<vmem>>, vector<1x8x8x8xbf16>
    %11 = vector.shape_cast %10 : vector<1x8x8x8xbf16> to vector<8x8x8xbf16>
    %12 = vector.shape_cast %11 : vector<8x8x8xbf16> to vector<64x8xbf16>
    %c0_13 = arith.constant 0 : index
    %c1_14 = arith.constant 1 : index
    %c0_15 = arith.constant 0 : index
    %c0_16 = arith.constant 0 : index
    %13 = vector.load %arg2[%c0_13, %c1_14, %c0_15, %c0_16] : memref<4x4x8x8xbf16, #tpu.memory_space<vmem>>, vector<1x1x8x8xbf16>
    %14 = vector.shape_cast %13 : vector<1x1x8x8xbf16> to vector<8x8xbf16>
    %cst_17 = arith.constant dense<0.000000e+00> : vector<64x8xf32>
    %15 = tpu.matmul %12, %14, %cst_17 {dimension_numbers = #tpu.dot_dimension_numbers<[1], [0], [0], [1], [0, 0, 1, 1], [], []>} : vector<64x8xbf16>, vector<8x8xbf16>, vector<64x8xf32> -> vector<64x8xf32>
    %16 = arith.addf %9, %15 : vector<64x8xf32>
    %c0_18 = arith.constant 0 : index
    %c1_19 = arith.constant 1 : index
    %c0_20 = arith.constant 0 : index
    %c0_21 = arith.constant 0 : index
    %17 = vector.load %arg1[%c0_18, %c1_19, %c0_20, %c0_21] : memref<1x10x10x8xbf16, #tpu.memory_space<vmem>>, vector<1x8x8x8xbf16>
    %18 = vector.shape_cast %17 : vector<1x8x8x8xbf16> to vector<8x8x8xbf16>
    %19 = vector.shape_cast %18 : vector<8x8x8xbf16> to vector<64x8xbf16>
    %c0_22 = arith.constant 0 : index
    %c2 = arith.constant 2 : index
    %c0_23 = arith.constant 0 : index
    %c0_24 = arith.constant 0 : index
    %20 = vector.load %arg2[%c0_22, %c2, %c0_23, %c0_24] : memref<4x4x8x8xbf16, #tpu.memory_space<vmem>>, vector<1x1x8x8xbf16>
    %21 = vector.shape_cast %20 : vector<1x1x8x8xbf16> to vector<8x8xbf16>
    %cst_25 = arith.constant dense<0.000000e+00> : vector<64x8xf32>
    %22 = tpu.matmul %19, %21, %cst_25 {dimension_numbers = #tpu.dot_dimension_numbers<[1], [0], [0], [1], [0, 0, 1, 1], [], []>} : vector<64x8xbf16>, vector<8x8xbf16>, vector<64x8xf32> -> vector<64x8xf32>
    %23 = arith.addf %16, %22 : vector<64x8xf32>
    %c0_26 = arith.constant 0 : index
    %c1_27 = arith.constant 1 : index
    %c1_28 = arith.constant 1 : index
    %c0_29 = arith.constant 0 : index
    %24 = vector.load %arg1[%c0_26, %c1_27, %c1_28, %c0_29] : memref<1x10x10x8xbf16, #tpu.memory_space<vmem>>, vector<1x8x8x8xbf16>
    %25 = vector.shape_cast %24 : vector<1x8x8x8xbf16> to vector<8x8x8xbf16>
    %26 = vector.shape_cast %25 : vector<8x8x8xbf16> to vector<64x8xbf16>
    %c0_30 = arith.constant 0 : index
    %c3 = arith.constant 3 : index
    %c0_31 = arith.constant 0 : index
    %c0_32 = arith.constant 0 : index
    %27 = vector.load %arg2[%c0_30, %c3, %c0_31, %c0_32] : memref<4x4x8x8xbf16, #tpu.memory_space<vmem>>, vector<1x1x8x8xbf16>
    %28 = vector.shape_cast %27 : vector<1x1x8x8xbf16> to vector<8x8xbf16>
    %cst_33 = arith.constant dense<0.000000e+00> : vector<64x8xf32>
    %29 = tpu.matmul %26, %28, %cst_33 {dimension_numbers = #tpu.dot_dimension_numbers<[1], [0], [0], [1], [0, 0, 1, 1], [], []>} : vector<64x8xbf16>, vector<8x8xbf16>, vector<64x8xf32> -> vector<64x8xf32>
    %30 = arith.addf %23, %29 : vector<64x8xf32>
    %31 = arith.truncf %30 : vector<64x8xf32> to vector<64x8xbf16>
    %c0_34 = arith.constant 0 : index
    %c0_35 = arith.constant 0 : index
    %c0_36 = arith.constant 0 : index
    %c0_37 = arith.constant 0 : index
    %32 = vector.load %arg3[%c0_34, %c0_35, %c0_36, %c0_37] : memref<4x1x64x8xbf16, #tpu.memory_space<vmem>>, vector<1x1x64x8xbf16>
    %33 = vector.shape_cast %32 : vector<1x1x64x8xbf16> to vector<64x8xbf16>
    %34 = vector.shape_cast %31 : vector<64x8xbf16> to vector<1x1x64x8xbf16>
    tpu.vector_store %arg3[%c0_34, %c0_35, %c0_36, %c0_37], %34 {strides = array<i32>} : memref<4x1x64x8xbf16, #tpu.memory_space<vmem>>, vector<1x1x64x8xbf16>,
    %35 = vector.shape_cast %30 : vector<64x8xf32> to vector<8x8x8xf32>
    %cst_38 = arith.constant dense<0.000000e+00> : vector<8x8xf32>
    %36 = vector.multi_reduction <add>, %35, %cst_38 [0] : vector<8x8x8xf32> to vector<8x8xf32>
    %37 = arith.addf %0, %36 : vector<8x8xf32>
    %38 = arith.mulf %30, %30 : vector<64x8xf32>
    %39 = vector.shape_cast %38 : vector<64x8xf32> to vector<8x8x8xf32>
    %cst_39 = arith.constant dense<0.000000e+00> : vector<8x8xf32>
    %40 = vector.multi_reduction <add>, %39, %cst_39 [0] : vector<8x8x8xf32> to vector<8x8xf32>
    %41 = arith.addf %1, %40 : vector<8x8xf32>
    %cst_40 = arith.constant 0.000000e+00 : f32
    %42 = vector.broadcast %cst_40 : f32 to vector<64x8xf32>
    %c0_41 = arith.constant 0 : index
    %c0_42 = arith.constant 0 : index
    %c1_43 = arith.constant 1 : index
    %c0_44 = arith.constant 0 : index
    %43 = vector.load %arg1[%c0_41, %c0_42, %c1_43, %c0_44] : memref<1x10x10x8xbf16, #tpu.memory_space<vmem>>, vector<1x8x8x8xbf16>
    %44 = vector.shape_cast %43 : vector<1x8x8x8xbf16> to vector<8x8x8xbf16>
    %45 = vector.shape_cast %44 : vector<8x8x8xbf16> to vector<64x8xbf16>
    %c1_45 = arith.constant 1 : index
    %c0_46 = arith.constant 0 : index
    %c0_47 = arith.constant 0 : index
    %c0_48 = arith.constant 0 : index
    %46 = vector.load %arg2[%c1_45, %c0_46, %c0_47, %c0_48] : memref<4x4x8x8xbf16, #tpu.memory_space<vmem>>, vector<1x1x8x8xbf16>
    %47 = vector.shape_cast %46 : vector<1x1x8x8xbf16> to vector<8x8xbf16>
    %cst_49 = arith.constant dense<0.000000e+00> : vector<64x8xf32>
    %48 = tpu.matmul %45, %47, %cst_49 {dimension_numbers = #tpu.dot_dimension_numbers<[1], [0], [0], [1], [0, 0, 1, 1], [], []>} : vector<64x8xbf16>, vector<8x8xbf16>, vector<64x8xf32> -> vector<64x8xf32>
    %49 = arith.addf %42, %48 : vector<64x8xf32>
    %c0_50 = arith.constant 0 : index
    %c0_51 = arith.constant 0 : index
    %c2_52 = arith.constant 2 : index
    %c0_53 = arith.constant 0 : index
    %50 = vector.load %arg1[%c0_50, %c0_51, %c2_52, %c0_53] : memref<1x10x10x8xbf16, #tpu.memory_space<vmem>>, vector<1x8x8x8xbf16>
    %51 = vector.shape_cast %50 : vector<1x8x8x8xbf16> to vector<8x8x8xbf16>
    %52 = vector.shape_cast %51 : vector<8x8x8xbf16> to vector<64x8xbf16>
    %c1_54 = arith.constant 1 : index
    %c1_55 = arith.constant 1 : index
    %c0_56 = arith.constant 0 : index
    %c0_57 = arith.constant 0 : index
    %53 = vector.load %arg2[%c1_54, %c1_55, %c0_56, %c0_57] : memref<4x4x8x8xbf16, #tpu.memory_space<vmem>>, vector<1x1x8x8xbf16>
    %54 = vector.shape_cast %53 : vector<1x1x8x8xbf16> to vector<8x8xbf16>
    %cst_58 = arith.constant dense<0.000000e+00> : vector<64x8xf32>
    %55 = tpu.matmul %52, %54, %cst_58 {dimension_numbers = #tpu.dot_dimension_numbers<[1], [0], [0], [1], [0, 0, 1, 1], [], []>} : vector<64x8xbf16>, vector<8x8xbf16>, vector<64x8xf32> -> vector<64x8xf32>
    %56 = arith.addf %49, %55 : vector<64x8xf32>
    %c0_59 = arith.constant 0 : index
    %c1_60 = arith.constant 1 : index
    %c1_61 = arith.constant 1 : index
    %c0_62 = arith.constant 0 : index
    %57 = vector.load %arg1[%c0_59, %c1_60, %c1_61, %c0_62] : memref<1x10x10x8xbf16, #tpu.memory_space<vmem>>, vector<1x8x8x8xbf16>
    %58 = vector.shape_cast %57 : vector<1x8x8x8xbf16> to vector<8x8x8xbf16>
    %59 = vector.shape_cast %58 : vector<8x8x8xbf16> to vector<64x8xbf16>
    %c1_63 = arith.constant 1 : index
    %c2_64 = arith.constant 2 : index
    %c0_65 = arith.constant 0 : index
    %c0_66 = arith.constant 0 : index
    %60 = vector.load %arg2[%c1_63, %c2_64, %c0_65, %c0_66] : memref<4x4x8x8xbf16, #tpu.memory_space<vmem>>, vector<1x1x8x8xbf16>
    %61 = vector.shape_cast %60 : vector<1x1x8x8xbf16> to vector<8x8xbf16>
    %cst_67 = arith.constant dense<0.000000e+00> : vector<64x8xf32>
    %62 = tpu.matmul %59, %61, %cst_67 {dimension_numbers = #tpu.dot_dimension_numbers<[1], [0], [0], [1], [0, 0, 1, 1], [], []>} : vector<64x8xbf16>, vector<8x8xbf16>, vector<64x8xf32> -> vector<64x8xf32>
    %63 = arith.addf %56, %62 : vector<64x8xf32>
    %c0_68 = arith.constant 0 : index
    %c1_69 = arith.constant 1 : index
    %c2_70 = arith.constant 2 : index
    %c0_71 = arith.constant 0 : index
    %64 = vector.load %arg1[%c0_68, %c1_69, %c2_70, %c0_71] : memref<1x10x10x8xbf16, #tpu.memory_space<vmem>>, vector<1x8x8x8xbf16>
    %65 = vector.shape_cast %64 : vector<1x8x8x8xbf16> to vector<8x8x8xbf16>
    %66 = vector.shape_cast %65 : vector<8x8x8xbf16> to vector<64x8xbf16>
    %c1_72 = arith.constant 1 : index
    %c3_73 = arith.constant 3 : index
    %c0_74 = arith.constant 0 : index
    %c0_75 = arith.constant 0 : index
    %67 = vector.load %arg2[%c1_72, %c3_73, %c0_74, %c0_75] : memref<4x4x8x8xbf16, #tpu.memory_space<vmem>>, vector<1x1x8x8xbf16>
    %68 = vector.shape_cast %67 : vector<1x1x8x8xbf16> to vector<8x8xbf16>
    %cst_76 = arith.constant dense<0.000000e+00> : vector<64x8xf32>
    %69 = tpu.matmul %66, %68, %cst_76 {dimension_numbers = #tpu.dot_dimension_numbers<[1], [0], [0], [1], [0, 0, 1, 1], [], []>} : vector<64x8xbf16>, vector<8x8xbf16>, vector<64x8xf32> -> vector<64x8xf32>
    %70 = arith.addf %63, %69 : vector<64x8xf32>
    %71 = arith.truncf %70 : vector<64x8xf32> to vector<64x8xbf16>
    %c1_77 = arith.constant 1 : index
    %c0_78 = arith.constant 0 : index
    %c0_79 = arith.constant 0 : index
    %c0_80 = arith.constant 0 : index
    %72 = vector.load %arg3[%c1_77, %c0_78, %c0_79, %c0_80] : memref<4x1x64x8xbf16, #tpu.memory_space<vmem>>, vector<1x1x64x8xbf16>
    %73 = vector.shape_cast %72 : vector<1x1x64x8xbf16> to vector<64x8xbf16>
    %74 = vector.shape_cast %71 : vector<64x8xbf16> to vector<1x1x64x8xbf16>
    tpu.vector_store %arg3[%c1_77, %c0_78, %c0_79, %c0_80], %74 {strides = array<i32>} : memref<4x1x64x8xbf16, #tpu.memory_space<vmem>>, vector<1x1x64x8xbf16>,
    %75 = vector.shape_cast %70 : vector<64x8xf32> to vector<8x8x8xf32>
    %cst_81 = arith.constant dense<0.000000e+00> : vector<8x8xf32>
    %76 = vector.multi_reduction <add>, %75, %cst_81 [0] : vector<8x8x8xf32> to vector<8x8xf32>
    %77 = arith.addf %37, %76 : vector<8x8xf32>
    %78 = arith.mulf %70, %70 : vector<64x8xf32>
    %79 = vector.shape_cast %78 : vector<64x8xf32> to vector<8x8x8xf32>
    %cst_82 = arith.constant dense<0.000000e+00> : vector<8x8xf32>
    %80 = vector.multi_reduction <add>, %79, %cst_82 [0] : vector<8x8x8xf32> to vector<8x8xf32>
    %81 = arith.addf %41, %80 : vector<8x8xf32>
    %cst_83 = arith.constant 0.000000e+00 : f32
    %82 = vector.broadcast %cst_83 : f32 to vector<64x8xf32>
    %c0_84 = arith.constant 0 : index
    %c1_85 = arith.constant 1 : index
    %c0_86 = arith.constant 0 : index
    %c0_87 = arith.constant 0 : index
    %83 = vector.load %arg1[%c0_84, %c1_85, %c0_86, %c0_87] : memref<1x10x10x8xbf16, #tpu.memory_space<vmem>>, vector<1x8x8x8xbf16>
    %84 = vector.shape_cast %83 : vector<1x8x8x8xbf16> to vector<8x8x8xbf16>
    %85 = vector.shape_cast %84 : vector<8x8x8xbf16> to vector<64x8xbf16>
    %c2_88 = arith.constant 2 : index
    %c0_89 = arith.constant 0 : index
    %c0_90 = arith.constant 0 : index
    %c0_91 = arith.constant 0 : index
    %86 = vector.load %arg2[%c2_88, %c0_89, %c0_90, %c0_91] : memref<4x4x8x8xbf16, #tpu.memory_space<vmem>>, vector<1x1x8x8xbf16>
    %87 = vector.shape_cast %86 : vector<1x1x8x8xbf16> to vector<8x8xbf16>
    %cst_92 = arith.constant dense<0.000000e+00> : vector<64x8xf32>
    %88 = tpu.matmul %85, %87, %cst_92 {dimension_numbers = #tpu.dot_dimension_numbers<[1], [0], [0], [1], [0, 0, 1, 1], [], []>} : vector<64x8xbf16>, vector<8x8xbf16>, vector<64x8xf32> -> vector<64x8xf32>
    %89 = arith.addf %82, %88 : vector<64x8xf32>
    %c0_93 = arith.constant 0 : index
    %c1_94 = arith.constant 1 : index
    %c1_95 = arith.constant 1 : index
    %c0_96 = arith.constant 0 : index
    %90 = vector.load %arg1[%c0_93, %c1_94, %c1_95, %c0_96] : memref<1x10x10x8xbf16, #tpu.memory_space<vmem>>, vector<1x8x8x8xbf16>
    %91 = vector.shape_cast %90 : vector<1x8x8x8xbf16> to vector<8x8x8xbf16>
    %92 = vector.shape_cast %91 : vector<8x8x8xbf16> to vector<64x8xbf16>
    %c2_97 = arith.constant 2 : index
    %c1_98 = arith.constant 1 : index
    %c0_99 = arith.constant 0 : index
    %c0_100 = arith.constant 0 : index
    %93 = vector.load %arg2[%c2_97, %c1_98, %c0_99, %c0_100] : memref<4x4x8x8xbf16, #tpu.memory_space<vmem>>, vector<1x1x8x8xbf16>
    %94 = vector.shape_cast %93 : vector<1x1x8x8xbf16> to vector<8x8xbf16>
    %cst_101 = arith.constant dense<0.000000e+00> : vector<64x8xf32>
    %95 = tpu.matmul %92, %94, %cst_101 {dimension_numbers = #tpu.dot_dimension_numbers<[1], [0], [0], [1], [0, 0, 1, 1], [], []>} : vector<64x8xbf16>, vector<8x8xbf16>, vector<64x8xf32> -> vector<64x8xf32>
    %96 = arith.addf %89, %95 : vector<64x8xf32>
    %c0_102 = arith.constant 0 : index
    %c2_103 = arith.constant 2 : index
    %c0_104 = arith.constant 0 : index
    %c0_105 = arith.constant 0 : index
    %97 = vector.load %arg1[%c0_102, %c2_103, %c0_104, %c0_105] : memref<1x10x10x8xbf16, #tpu.memory_space<vmem>>, vector<1x8x8x8xbf16>
    %98 = vector.shape_cast %97 : vector<1x8x8x8xbf16> to vector<8x8x8xbf16>
    %99 = vector.shape_cast %98 : vector<8x8x8xbf16> to vector<64x8xbf16>
    %c2_106 = arith.constant 2 : index
    %c2_107 = arith.constant 2 : index
    %c0_108 = arith.constant 0 : index
    %c0_109 = arith.constant 0 : index
    %100 = vector.load %arg2[%c2_106, %c2_107, %c0_108, %c0_109] : memref<4x4x8x8xbf16, #tpu.memory_space<vmem>>, vector<1x1x8x8xbf16>
    %101 = vector.shape_cast %100 : vector<1x1x8x8xbf16> to vector<8x8xbf16>
    %cst_110 = arith.constant dense<0.000000e+00> : vector<64x8xf32>
    %102 = tpu.matmul %99, %101, %cst_110 {dimension_numbers = #tpu.dot_dimension_numbers<[1], [0], [0], [1], [0, 0, 1, 1], [], []>} : vector<64x8xbf16>, vector<8x8xbf16>, vector<64x8xf32> -> vector<64x8xf32>
    %103 = arith.addf %96, %102 : vector<64x8xf32>
    %c0_111 = arith.constant 0 : index
    %c2_112 = arith.constant 2 : index
    %c1_113 = arith.constant 1 : index
    %c0_114 = arith.constant 0 : index
    %104 = vector.load %arg1[%c0_111, %c2_112, %c1_113, %c0_114] : memref<1x10x10x8xbf16, #tpu.memory_space<vmem>>, vector<1x8x8x8xbf16>
    %105 = vector.shape_cast %104 : vector<1x8x8x8xbf16> to vector<8x8x8xbf16>
    %106 = vector.shape_cast %105 : vector<8x8x8xbf16> to vector<64x8xbf16>
    %c2_115 = arith.constant 2 : index
    %c3_116 = arith.constant 3 : index
    %c0_117 = arith.constant 0 : index
    %c0_118 = arith.constant 0 : index
    %107 = vector.load %arg2[%c2_115, %c3_116, %c0_117, %c0_118] : memref<4x4x8x8xbf16, #tpu.memory_space<vmem>>, vector<1x1x8x8xbf16>
    %108 = vector.shape_cast %107 : vector<1x1x8x8xbf16> to vector<8x8xbf16>
    %cst_119 = arith.constant dense<0.000000e+00> : vector<64x8xf32>
    %109 = tpu.matmul %106, %108, %cst_119 {dimension_numbers = #tpu.dot_dimension_numbers<[1], [0], [0], [1], [0, 0, 1, 1], [], []>} : vector<64x8xbf16>, vector<8x8xbf16>, vector<64x8xf32> -> vector<64x8xf32>
    %110 = arith.addf %103, %109 : vector<64x8xf32>
    %111 = arith.truncf %110 : vector<64x8xf32> to vector<64x8xbf16>
    %c2_120 = arith.constant 2 : index
    %c0_121 = arith.constant 0 : index
    %c0_122 = arith.constant 0 : index
    %c0_123 = arith.constant 0 : index
    %112 = vector.load %arg3[%c2_120, %c0_121, %c0_122, %c0_123] : memref<4x1x64x8xbf16, #tpu.memory_space<vmem>>, vector<1x1x64x8xbf16>
    %113 = vector.shape_cast %112 : vector<1x1x64x8xbf16> to vector<64x8xbf16>
    %114 = vector.shape_cast %111 : vector<64x8xbf16> to vector<1x1x64x8xbf16>
    tpu.vector_store %arg3[%c2_120, %c0_121, %c0_122, %c0_123], %114 {strides = array<i32>} : memref<4x1x64x8xbf16, #tpu.memory_space<vmem>>, vector<1x1x64x8xbf16>,
    %115 = vector.shape_cast %110 : vector<64x8xf32> to vector<8x8x8xf32>
    %cst_124 = arith.constant dense<0.000000e+00> : vector<8x8xf32>
    %116 = vector.multi_reduction <add>, %115, %cst_124 [0] : vector<8x8x8xf32> to vector<8x8xf32>
    %117 = arith.addf %77, %116 : vector<8x8xf32>
    %118 = arith.mulf %110, %110 : vector<64x8xf32>
    %119 = vector.shape_cast %118 : vector<64x8xf32> to vector<8x8x8xf32>
    %cst_125 = arith.constant dense<0.000000e+00> : vector<8x8xf32>
    %120 = vector.multi_reduction <add>, %119, %cst_125 [0] : vector<8x8x8xf32> to vector<8x8xf32>
    %121 = arith.addf %81, %120 : vector<8x8xf32>
    %cst_126 = arith.constant 0.000000e+00 : f32
    %122 = vector.broadcast %cst_126 : f32 to vector<64x8xf32>
    %c0_127 = arith.constant 0 : index
    %c1_128 = arith.constant 1 : index
    %c1_129 = arith.constant 1 : index
    %c0_130 = arith.constant 0 : index
    %123 = vector.load %arg1[%c0_127, %c1_128, %c1_129, %c0_130] : memref<1x10x10x8xbf16, #tpu.memory_space<vmem>>, vector<1x8x8x8xbf16>
    %124 = vector.shape_cast %123 : vector<1x8x8x8xbf16> to vector<8x8x8xbf16>
    %125 = vector.shape_cast %124 : vector<8x8x8xbf16> to vector<64x8xbf16>
    %c3_131 = arith.constant 3 : index
    %c0_132 = arith.constant 0 : index
    %c0_133 = arith.constant 0 : index
    %c0_134 = arith.constant 0 : index
    %126 = vector.load %arg2[%c3_131, %c0_132, %c0_133, %c0_134] : memref<4x4x8x8xbf16, #tpu.memory_space<vmem>>, vector<1x1x8x8xbf16>
    %127 = vector.shape_cast %126 : vector<1x1x8x8xbf16> to vector<8x8xbf16>
    %cst_135 = arith.constant dense<0.000000e+00> : vector<64x8xf32>
    %128 = tpu.matmul %125, %127, %cst_135 {dimension_numbers = #tpu.dot_dimension_numbers<[1], [0], [0], [1], [0, 0, 1, 1], [], []>} : vector<64x8xbf16>, vector<8x8xbf16>, vector<64x8xf32> -> vector<64x8xf32>
    %129 = arith.addf %122, %128 : vector<64x8xf32>
    %c0_136 = arith.constant 0 : index
    %c1_137 = arith.constant 1 : index
    %c2_138 = arith.constant 2 : index
    %c0_139 = arith.constant 0 : index
    %130 = vector.load %arg1[%c0_136, %c1_137, %c2_138, %c0_139] : memref<1x10x10x8xbf16, #tpu.memory_space<vmem>>, vector<1x8x8x8xbf16>
    %131 = vector.shape_cast %130 : vector<1x8x8x8xbf16> to vector<8x8x8xbf16>
    %132 = vector.shape_cast %131 : vector<8x8x8xbf16> to vector<64x8xbf16>
    %c3_140 = arith.constant 3 : index
    %c1_141 = arith.constant 1 : index
    %c0_142 = arith.constant 0 : index
    %c0_143 = arith.constant 0 : index
    %133 = vector.load %arg2[%c3_140, %c1_141, %c0_142, %c0_143] : memref<4x4x8x8xbf16, #tpu.memory_space<vmem>>, vector<1x1x8x8xbf16>
    %134 = vector.shape_cast %133 : vector<1x1x8x8xbf16> to vector<8x8xbf16>
    %cst_144 = arith.constant dense<0.000000e+00> : vector<64x8xf32>
    %135 = tpu.matmul %132, %134, %cst_144 {dimension_numbers = #tpu.dot_dimension_numbers<[1], [0], [0], [1], [0, 0, 1, 1], [], []>} : vector<64x8xbf16>, vector<8x8xbf16>, vector<64x8xf32> -> vector<64x8xf32>
    %136 = arith.addf %129, %135 : vector<64x8xf32>
    %c0_145 = arith.constant 0 : index
    %c2_146 = arith.constant 2 : index
    %c1_147 = arith.constant 1 : index
    %c0_148 = arith.constant 0 : index
    %137 = vector.load %arg1[%c0_145, %c2_146, %c1_147, %c0_148] : memref<1x10x10x8xbf16, #tpu.memory_space<vmem>>, vector<1x8x8x8xbf16>
    %138 = vector.shape_cast %137 : vector<1x8x8x8xbf16> to vector<8x8x8xbf16>
    %139 = vector.shape_cast %138 : vector<8x8x8xbf16> to vector<64x8xbf16>
    %c3_149 = arith.constant 3 : index
    %c2_150 = arith.constant 2 : index
    %c0_151 = arith.constant 0 : index
    %c0_152 = arith.constant 0 : index
    %140 = vector.load %arg2[%c3_149, %c2_150, %c0_151, %c0_152] : memref<4x4x8x8xbf16, #tpu.memory_space<vmem>>, vector<1x1x8x8xbf16>
    %141 = vector.shape_cast %140 : vector<1x1x8x8xbf16> to vector<8x8xbf16>
    %cst_153 = arith.constant dense<0.000000e+00> : vector<64x8xf32>
    %142 = tpu.matmul %139, %141, %cst_153 {dimension_numbers = #tpu.dot_dimension_numbers<[1], [0], [0], [1], [0, 0, 1, 1], [], []>} : vector<64x8xbf16>, vector<8x8xbf16>, vector<64x8xf32> -> vector<64x8xf32>
    %143 = arith.addf %136, %142 : vector<64x8xf32>
    %c0_154 = arith.constant 0 : index
    %c2_155 = arith.constant 2 : index
    %c2_156 = arith.constant 2 : index
    %c0_157 = arith.constant 0 : index
    %144 = vector.load %arg1[%c0_154, %c2_155, %c2_156, %c0_157] : memref<1x10x10x8xbf16, #tpu.memory_space<vmem>>, vector<1x8x8x8xbf16>
    %145 = vector.shape_cast %144 : vector<1x8x8x8xbf16> to vector<8x8x8xbf16>
    %146 = vector.shape_cast %145 : vector<8x8x8xbf16> to vector<64x8xbf16>
    %c3_158 = arith.constant 3 : index
    %c3_159 = arith.constant 3 : index
    %c0_160 = arith.constant 0 : index
    %c0_161 = arith.constant 0 : index
    %147 = vector.load %arg2[%c3_158, %c3_159, %c0_160, %c0_161] : memref<4x4x8x8xbf16, #tpu.memory_space<vmem>>, vector<1x1x8x8xbf16>
    %148 = vector.shape_cast %147 : vector<1x1x8x8xbf16> to vector<8x8xbf16>
    %cst_162 = arith.constant dense<0.000000e+00> : vector<64x8xf32>
    %149 = tpu.matmul %146, %148, %cst_162 {dimension_numbers = #tpu.dot_dimension_numbers<[1], [0], [0], [1], [0, 0, 1, 1], [], []>} : vector<64x8xbf16>, vector<8x8xbf16>, vector<64x8xf32> -> vector<64x8xf32>
    %150 = arith.addf %143, %149 : vector<64x8xf32>
    %151 = arith.truncf %150 : vector<64x8xf32> to vector<64x8xbf16>
    %c3_163 = arith.constant 3 : index
    %c0_164 = arith.constant 0 : index
    %c0_165 = arith.constant 0 : index
    %c0_166 = arith.constant 0 : index
    %152 = vector.load %arg3[%c3_163, %c0_164, %c0_165, %c0_166] : memref<4x1x64x8xbf16, #tpu.memory_space<vmem>>, vector<1x1x64x8xbf16>
    %153 = vector.shape_cast %152 : vector<1x1x64x8xbf16> to vector<64x8xbf16>
    %154 = vector.shape_cast %151 : vector<64x8xbf16> to vector<1x1x64x8xbf16>
    tpu.vector_store %arg3[%c3_163, %c0_164, %c0_165, %c0_166], %154 {strides = array<i32>} : memref<4x1x64x8xbf16, #tpu.memory_space<vmem>>, vector<1x1x64x8xbf16>,
    %155 = vector.shape_cast %150 : vector<64x8xf32> to vector<8x8x8xf32>
    %cst_167 = arith.constant dense<0.000000e+00> : vector<8x8xf32>
    %156 = vector.multi_reduction <add>, %155, %cst_167 [0] : vector<8x8x8xf32> to vector<8x8xf32>
    %157 = arith.addf %117, %156 : vector<8x8xf32>
    %158 = arith.mulf %150, %150 : vector<64x8xf32>
    %159 = vector.shape_cast %158 : vector<64x8xf32> to vector<8x8x8xf32>
    %cst_168 = arith.constant dense<0.000000e+00> : vector<8x8xf32>
    %160 = vector.multi_reduction <add>, %159, %cst_168 [0] : vector<8x8x8xf32> to vector<8x8xf32>
    %161 = arith.addf %121, %160 : vector<8x8xf32>
    %c0_169 = arith.constant 0 : index
    %c0_170 = arith.constant 0 : index
    %c0_171 = arith.constant 0 : index
    %162 = vector.load %arg4[%c0_169, %c0_170, %c0_171] : memref<1x8x8xf32, #tpu.memory_space<vmem>>, vector<1x8x8xf32>
    %163 = vector.shape_cast %162 : vector<1x8x8xf32> to vector<8x8xf32>
    %164 = vector.shape_cast %157 : vector<8x8xf32> to vector<1x8x8xf32>
    tpu.vector_store %arg4[%c0_169, %c0_170, %c0_171], %164 {strides = array<i32>} : memref<1x8x8xf32, #tpu.memory_space<vmem>>, vector<1x8x8xf32>,
    %c0_172 = arith.constant 0 : index
    %c0_173 = arith.constant 0 : index
    %c0_174 = arith.constant 0 : index
    %165 = vector.load %arg5[%c0_172, %c0_173, %c0_174] : memref<1x8x8xf32, #tpu.memory_space<vmem>>, vector<1x8x8xf32>
    %166 = vector.shape_cast %165 : vector<1x8x8xf32> to vector<8x8xf32>
    %167 = vector.shape_cast %161 : vector<8x8xf32> to vector<1x8x8xf32>
    tpu.vector_store %arg5[%c0_172, %c0_173, %c0_174], %167 {strides = array<i32>} : memref<1x8x8xf32, #tpu.memory_space<vmem>>, vector<1x8x8xf32>,
    return
  }
  func.func @transform_0(%arg0: i32) -> (i32, i32, i32, i32) {
    %c0_i32 = arith.constant 0 : i32
    %c0_i32_0 = arith.constant 0 : i32
    %c0_i32_1 = arith.constant 0 : i32
    %c0_i32_2 = arith.constant 0 : i32
    return %arg0, %c0_i32, %c0_i32_0, %c0_i32_1 : i32, i32, i32, i32
  }
  func.func @transform_1(%arg0: i32) -> (i32, i32, i32, i32) {
    %c0_i32 = arith.constant 0 : i32
    %c0_i32_0 = arith.constant 0 : i32
    %c0_i32_1 = arith.constant 0 : i32
    %c0_i32_2 = arith.constant 0 : i32
    %c0_i32_3 = arith.constant 0 : i32
    return %c0_i32, %c0_i32_0, %c0_i32_1, %c0_i32_2 : i32, i32, i32, i32
  }
  func.func @transform_2(%arg0: i32) -> (i32, i32, i32, i32) {
    %c0_i32 = arith.constant 0 : i32
    %c0_i32_0 = arith.constant 0 : i32
    %c0_i32_1 = arith.constant 0 : i32
    %c0_i32_2 = arith.constant 0 : i32
    return %c0_i32, %arg0, %c0_i32_0, %c0_i32_1 : i32, i32, i32, i32
  }
  func.func @transform_3(%arg0: i32) -> (i32, i32, i32) {
    %c0_i32 = arith.constant 0 : i32
    %c0_i32_0 = arith.constant 0 : i32
    %c0_i32_1 = arith.constant 0 : i32
    return %arg0, %c0_i32, %c0_i32_0 : i32, i32, i32
  }
  func.func @transform_4(%arg0: i32) -> (i32, i32, i32) {
    %c0_i32 = arith.constant 0 : i32
    %c0_i32_0 = arith.constant 0 : i32
    %c0_i32_1 = arith.constant 0 : i32
    return %arg0, %c0_i32, %c0_i32_0 : i32, i32, i32
  }
}

</mosaic_0001>

<llo_original>
// kernel: unet_up_forward.1
$region0: #{unet_up_forward.1}
  #allocation0 [shape = 'u32[]', space=smem, size = 0x4, offset = 0x4, fixed_abs, tag = 'smem constant byte address 0x4 - core index']
  #allocation1 [shape = 'u32[72,128]{1,0:T(1,128)}', space=vmem, size = 0x9000, scoped, tag = 'internal scratch']
  %s0 = inlined_call_operand.vmem [shape: bf16[2,10,10,8], index: 0, kind: input, shape index: {}]
  %s1 = inlined_call_operand.vmem [shape: bf16[4,4,8,8], index: 1, kind: input, shape index: {}]
  %s2 = inlined_call_operand.vmem [shape: bf16[4,2,64,8], index: 2, kind: output, shape index: {0}]
  %s3 = inlined_call_operand.vmem [shape: f32[2,8,8], index: 3, kind: output, shape index: {1}]
  %s4 = inlined_call_operand.vmem [shape: f32[2,8,8], index: 4, kind: output, shape index: {2}]
  %5 = xla_tuple %s2, %s3, %s4
  %s6 = sld [smem:[#allocation0]]
  $region94: #{unet_up_forward.1} parent=0
    _
  %s8 = ssub.s32 1, %s6
  %s9 = scalar_select 0, %s8, %s6
  $region1: #{unet_up_forward.1} parent=0
    #allocation2 [shape = 'u8[131072]{0}', space=vmem, size = 0x20000, scoped, tag = 'output window, operand 0']
    loop: start=0, step=1, limit=4
    $region2: #{unet_up_forward.1} parent=1 // loop_pre_header
      _
    $region3: #{unet_up_forward.1} parent=1 // loop_header
      %s11 = sphi 0, %s15
      %p12 = scmp.ge.s32.totalorder %s11, 4
      %s21 = sphi 0, %s23
      %s24 = sphi 0, %s21
      %s25 = sphi 0, %s24
      %s41 = sphi 0, %s25
      %s45 = sphi 0, %s45
      %s47 = sphi 0, %s45
      %s48 = sphi 0, %s47
      %s62 = sphi 0, %s48
      %s68 = sphi 0, %s70
      %s71 = sphi 0, %s68
      %s72 = sphi 0, %s71
      %s88 = sphi 0, %s72
      %s94 = sphi 0, %s96
      %s97 = sphi 0, %s94
      %s98 = sphi 0, %s97
      %s114 = sphi 0, %s98
      %s120 = sphi 0, %s122
      %s123 = sphi 0, %s120
      %s124 = sphi 0, %s123
      %s140 = sphi 0, %s124
    $region4: #{unet_up_forward.1} parent=1 // loop_header_branch
      %14 = sbr.rel (%p12) target = $region8
    $region5: #{unet_up_forward.1} parent=1 // loop_body
      %s16 = ssub.s32 %s11, 1
      %s17 = ssub.s32 %s11, 2
      %s18 = sadd.s32 %s11, 1
      %s19 = ssub.s32 %s11, %s18
      %p20 = scmp.eq.s32.totalorder %s19, 0
      %s22 = sadd.s32 %s21, 1
      %s23 = scalar_select %p20, %s21, %s22
      %p26 = pneg %p20
      %p27 = scmp.eq.s32.totalorder %s11, 1
      %p28 = por %p26, %p27
      %p29 = scmp.ne.s32.totalorder %s21, %s24
      %p30 = scmp.eq.s32.totalorder %s11, 0
      %p31 = por %p29, %p30
      %p32 = scmp.ne.s32.totalorder %s21, %s24
      %p33 = scmp.eq.s32.totalorder %s16, 1
      %p34 = por %p32, %p33
      %p35 = scmp.ne.s32.totalorder %s24, %s25
      %p36 = scmp.eq.s32.totalorder %s16, 0
      %p37 = por %p35, %p36
      %p38 = scmp.ne.s32.totalorder %s24, %s25
      %p39 = scmp.eq.s32.totalorder %s17, 1
      %p40 = por %p38, %p39
      %p42 = scmp.ne.s32.totalorder %s25, %s41
      %p43 = scmp.eq.s32.totalorder %s17, 0
      %p44 = por %p42, %p43
      %s46 = sadd.s32 %s45, 1
      %p49 = scmp.eq.s32.totalorder %s11, 1
      %p50 = scmp.ne.s32.totalorder %s45, %s47
      %p51 = scmp.eq.s32.totalorder %s11, 0
      %p52 = por %p50, %p51
      %p53 = scmp.ne.s32.totalorder %s45, %s47
      %p54 = scmp.eq.s32.totalorder %s16, 1
      %p55 = por %p53, %p54
      %p56 = scmp.ne.s32.totalorder %s47, %s48
      %p57 = scmp.eq.s32.totalorder %s16, 0
      %p58 = por %p56, %p57
      %p59 = scmp.ne.s32.totalorder %s47, %s48
      %p60 = scmp.eq.s32.totalorder %s17, 1
      %p61 = por %p59, %p60
      %p63 = scmp.ne.s32.totalorder %s48, %s62
      %p64 = scmp.eq.s32.totalorder %s17, 0
      %p65 = por %p63, %p64
      %s66 = ssub.s32 %s11, %s18
      %p67 = scmp.eq.s32.totalorder %s66, 0
      %s69 = sadd.s32 %s68, 1
      %s70 = scalar_select %p67, %s68, %s69
      %p73 = pneg %p67
      %p74 = scmp.eq.s32.totalorder %s11, 1
      %p75 = por %p73, %p74
      %p76 = scmp.ne.s32.totalorder %s68, %s71
      %p77 = scmp.eq.s32.totalorder %s11, 0
      %p78 = por %p76, %p77
      %p79 = scmp.ne.s32.totalorder %s68, %s71
      %p80 = scmp.eq.s32.totalorder %s16, 1
      %p81 = por %p79, %p80
      %p82 = scmp.ne.s32.totalorder %s71, %s72
      %p83 = scmp.eq.s32.totalorder %s16, 0
      %p84 = por %p82, %p83
      %p85 = scmp.ne.s32.totalorder %s71, %s72
      %p86 = scmp.eq.s32.totalorder %s17, 1
      %p87 = por %p85, %p86
      %p89 = scmp.ne.s32.totalorder %s72, %s88
      %p90 = scmp.eq.s32.totalorder %s17, 0
      %p91 = por %p89, %p90
      %s92 = ssub.s32 %s11, %s18
      %p93 = scmp.eq.s32.totalorder %s92, 0
      %s95 = sadd.s32 %s94, 1
      %s96 = scalar_select %p93, %s94, %s95
      %p99 = pneg %p93
      %p100 = scmp.eq.s32.totalorder %s11, 1
      %p101 = por %p99, %p100
      %p102 = scmp.ne.s32.totalorder %s94, %s97
      %p103 = scmp.eq.s32.totalorder %s11, 0
      %p104 = por %p102, %p103
      %p105 = scmp.ne.s32.totalorder %s94, %s97
      %p106 = scmp.eq.s32.totalorder %s16, 1
      %p107 = por %p105, %p106
      %p108 = scmp.ne.s32.totalorder %s97, %s98
      %p109 = scmp.eq.s32.totalorder %s16, 0
      %p110 = por %p108, %p109
      %p111 = scmp.ne.s32.totalorder %s97, %s98
      %p112 = scmp.eq.s32.totalorder %s17, 1
      %p113 = por %p111, %p112
      %p115 = scmp.ne.s32.totalorder %s98, %s114
      %p116 = scmp.eq.s32.totalorder %s17, 0
      %p117 = por %p115, %p116
      %s118 = ssub.s32 %s11, %s18
      %p119 = scmp.eq.s32.totalorder %s118, 0
      %s121 = sadd.s32 %s120, 1
      %s122 = scalar_select %p119, %s120, %s121
      %p125 = pneg %p119
      %p126 = scmp.eq.s32.totalorder %s11, 1
      %p127 = por %p125, %p126
      %p128 = scmp.ne.s32.totalorder %s120, %s123
      %p129 = scmp.eq.s32.totalorder %s11, 0
      %p130 = por %p128, %p129
      %p131 = scmp.ne.s32.totalorder %s120, %s123
      %p132 = scmp.eq.s32.totalorder %s16, 1
      %p133 = por %p131, %p132
      %p134 = scmp.ne.s32.totalorder %s123, %s124
      %p135 = scmp.eq.s32.totalorder %s16, 0
      %p136 = por %p134, %p135
      %p137 = scmp.ne.s32.totalorder %s123, %s124
      %p138 = scmp.eq.s32.totalorder %s17, 1
      %p139 = por %p137, %p138
      %p141 = scmp.ne.s32.totalorder %s124, %s140
      %p142 = scmp.eq.s32.totalorder %s17, 0
      %p143 = por %p141, %p142
      %p144 = scmp.le.s32.totalorder 1, %s11
      %p145 = scmp.lt.s32.totalorder %s11, 3
      %p146 = pnand %p144, %p145
      %p147 = pneg %p146
      // Predicated region
      $region9: #{unet_up_forward.1} parent=5 // pred_check
        _
      $region10: #{unet_up_forward.1} parent=5 // pred_check_branch
        %149 = sbr.rel (%p146) target = $region12
      $region11: #{unet_up_forward.1} parent=5 // pred_region
        %s150 = ssub.s32 %s11, 1
        // Predicated region
        $region13: #{unet_up_forward.1} parent=11 // pred_check
          %p151 = pneg %p58
        $region14: #{unet_up_forward.1} parent=11 // pred_check_branch
          %153 = sbr.rel (%p151) target = $region16
        $region15: #{unet_up_forward.1} parent=11 // pred_region
          _
        $region16: #{unet_up_forward.1} parent=11 // pred_fallthru
          _
      $region12: #{unet_up_forward.1} parent=5 // pred_fallthru
        _
      %p154 = scmp.lt.s32.totalorder %s11, 2
      // Predicated region
      $region17: #{unet_up_forward.1} parent=5 // pred_check
        %p155 = pneg %p154
      $region18: #{unet_up_forward.1} parent=5 // pred_check_branch
        %157 = sbr.rel (%p155) target = $region20
      $region19: #{unet_up_forward.1} parent=5 // pred_region
        // Predicated region
        $region21: #{unet_up_forward.1} parent=19 // pred_check
          %p158 = pneg %p31
        $region22: #{unet_up_forward.1} parent=19 // pred_check_branch
          %160 = sbr.rel (%p158) target = $region24
        $region23: #{unet_up_forward.1} parent=19 // pred_region
          %p161 = scmp.lt.s32.totalorder %s11, 1
          %s162 = scalar_select %p161, %s11, 1
          %s163 = smul.addr %s162, 20
          %s164 = smul.addr %s163, 4
          %s165 = scalar_lea.vmem %s0, %s164
        $region24: #{unet_up_forward.1} parent=19 // pred_fallthru
          _
      $region20: #{unet_up_forward.1} parent=5 // pred_fallthru
        _
      %p166 = scmp.le.s32.totalorder 1, %s11
      %p167 = scmp.lt.s32.totalorder %s11, 3
      %p168 = pnand %p166, %p167
      %p169 = pneg %p168
      // Predicated region
      $region25: #{unet_up_forward.1} parent=5 // pred_check
        _
      $region26: #{unet_up_forward.1} parent=5 // pred_check_branch
        %171 = sbr.rel (%p168) target = $region28
      $region27: #{unet_up_forward.1} parent=5 // pred_region
        %s172 = ssub.s32 %s11, 1
        %p173 = scmp.lt.s32.totalorder %s16, 1
        %s174 = scalar_select %p173, %s16, 1
        %s175 = smul.addr %s174, 20
        %s176 = smul.addr %s175, 4
        %s177 = scalar_lea.vmem %s0, %s176
        %p178 = pneg %p37
        %p179 = pneg %p34
        %p180 = pneg %p58
        %p181 = pneg %p55
        %p182 = pneg %p84
        %p183 = pneg %p81
        %s184 = sand.u32 %s71, 1
        %s185 = sand.u32 %s71, 1
        %s186 = smul.addr %s185, 128
        %s187 = scalar_lea.vmem [#allocation2], %s186
        %p188 = pneg %p110
        %p189 = pneg %p107
        %p190 = scmp.lt.s32.totalorder %s16, 1
        %s191 = scalar_select %p190, %s16, 1
        %s192 = smul.addr %s191, 8
        %s193 = scalar_lea.vmem %s3, %s192
        %p194 = pneg %p136
        %p195 = pneg %p133
        %p196 = scmp.lt.s32.totalorder %s16, 1
        %s197 = scalar_select %p196, %s16, 1
        %s198 = smul.addr %s197, 8
        %s199 = scalar_lea.vmem %s4, %s198
        %p200 = scmp.lt.s32.totalorder %s16, 1
        %s201 = scalar_select %p200, %s16, 1
        %s202 = smul.addr %s201, 20
        %s203 = smul.addr %s202, 4
        %s204 = scalar_lea.vmem %s0, %s203
        %p205 = scmp.lt.s32.totalorder %s16, 1
        %s206 = scalar_select %p205, %s16, 1
        %s207 = smul.addr %s206, 8
        %s208 = scalar_lea.vmem %s3, %s207
        %p209 = scmp.lt.s32.totalorder %s16, 1
        %s210 = scalar_select %p209, %s16, 1
        %s211 = smul.addr %s210, 8
        %s212 = scalar_lea.vmem %s4, %s211
        %v214 = vld [vmem:[%s204] sm:$0xf]
        %v215 = vld [vmem:[%s204 + $0x8] sm:$0xf]
        %v216 = vld [vmem:[%s204 + $0x10] sm:$0xf]
        %v217 = vld [vmem:[%s204 + $0x18] sm:$0xf]
        %v218 = vld [vmem:[%s204 + $0x20] sm:$0xf]
        %v219 = vld [vmem:[%s204 + $0x28] sm:$0xf]
        %v220 = vld [vmem:[%s204 + $0x30] sm:$0xf]
        %v221 = vld [vmem:[%s204 + $0x38] sm:$0xf]
        %v222 = vld [vmem:[%s1] sm:$0xf]
        %v223 = vld [vmem:[%s204 + $0x4] sm:$0x1]
        %v224 = vld [vmem:[%s204 + $0xc] sm:$0x1]
        %v225 = vld [vmem:[%s204 + $0x14] sm:$0x1]
        %v226 = vld [vmem:[%s204 + $0x1c] sm:$0x1]
        %v227 = vld [vmem:[%s204 + $0x24] sm:$0x1]
        %v228 = vld [vmem:[%s204 + $0x2c] sm:$0x1]
        %v229 = vld [vmem:[%s204 + $0x34] sm:$0x1]
        %v230 = vld [vmem:[%s204 + $0x3c] sm:$0x1]
        %vm231 = vsmask.f32 3328
        %vm232 = vsmask.f32 7440
        %vm233 = vmor %vm231, %vm232
        %v235 = vshrl.u32 %v214, 16
        %v237 = vrot.slane %v235, 4
        %v238 = vshll.u32 %v214, 16
        %v240 = vrot.slane %v238, 5
        %v241 = vor.u32 %v237, %v240
        %v242 = vrot.slane %v241, 4
        %v244 = vshll.u32 %v223, 16
        %v246 = vrot.slane %v244, 5
        %v247 = vsel %vm233, %v242, %v246
        %v249 = vshrl.u32 %v215, 16
        %v251 = vrot.slane %v249, 4
        %v252 = vshll.u32 %v215, 16
        %v254 = vrot.slane %v252, 5
        %v255 = vor.u32 %v251, %v254
        %v256 = vrot.slane %v255, 4
        %v258 = vshll.u32 %v224, 16
        %v260 = vrot.slane %v258, 5
        %v261 = vsel %vm233, %v256, %v260
        %v263 = vshrl.u32 %v216, 16
        %v265 = vrot.slane %v263, 4
        %v266 = vshll.u32 %v216, 16
        %v268 = vrot.slane %v266, 5
        %v269 = vor.u32 %v265, %v268
        %v270 = vrot.slane %v269, 4
        %v272 = vshll.u32 %v225, 16
        %v274 = vrot.slane %v272, 5
        %v275 = vsel %vm233, %v270, %v274
        %v277 = vshrl.u32 %v217, 16
        %v279 = vrot.slane %v277, 4
        %v280 = vshll.u32 %v217, 16
        %v282 = vrot.slane %v280, 5
        %v283 = vor.u32 %v279, %v282
        %v284 = vrot.slane %v283, 4
        %v286 = vshll.u32 %v226, 16
        %v288 = vrot.slane %v286, 5
        %v289 = vsel %vm233, %v284, %v288
        %v291 = vshrl.u32 %v218, 16
        %v293 = vrot.slane %v291, 4
        %v294 = vshll.u32 %v218, 16
        %v296 = vrot.slane %v294, 5
        %v297 = vor.u32 %v293, %v296
        %v298 = vrot.slane %v297, 4
        %v300 = vshll.u32 %v227, 16
        %v302 = vrot.slane %v300, 5
        %v303 = vsel %vm233, %v298, %v302
        %v305 = vshrl.u32 %v219, 16
        %v307 = vrot.slane %v305, 4
        %v308 = vshll.u32 %v219, 16
        %v310 = vrot.slane %v308, 5
        %v311 = vor.u32 %v307, %v310
        %v312 = vrot.slane %v311, 4
        %v314 = vshll.u32 %v228, 16
        %v316 = vrot.slane %v314, 5
        %v317 = vsel %vm233, %v312, %v316
        %v319 = vshrl.u32 %v220, 16
        %v321 = vrot.slane %v319, 4
        %v322 = vshll.u32 %v220, 16
        %v324 = vrot.slane %v322, 5
        %v325 = vor.u32 %v321, %v324
        %v326 = vrot.slane %v325, 4
        %v328 = vshll.u32 %v229, 16
        %v330 = vrot.slane %v328, 5
        %v331 = vsel %vm233, %v326, %v330
        %v333 = vshrl.u32 %v221, 16
        %v335 = vrot.slane %v333, 4
        %v336 = vshll.u32 %v221, 16
        %v338 = vrot.slane %v336, 5
        %v339 = vor.u32 %v335, %v338
        %v340 = vrot.slane %v339, 4
        %v342 = vshll.u32 %v230, 16
        %v344 = vrot.slane %v342, 5
        %v345 = vsel %vm233, %v340, %v344
        %s346 = scalar_lea.vmem %s1, 4
        %v347 = vld [vmem:[%s346] sm:$0xf]
        %v348 = vunpack.c.l.b16 %v247
        %v349 = vunpack.c.l.b16 %v261
        %v350 = vunpack.c.l.b16 %v275
        %v351 = vunpack.c.l.b16 %v289
        %v352 = vunpack.c.l.b16 %v303
        %v353 = vunpack.c.l.b16 %v317
        %v354 = vunpack.c.l.b16 %v331
        %v355 = vunpack.c.l.b16 %v345
        %v356 = vpack.c.b16 %v349, %v348
        %v357 = vpack.c.b16 %v351, %v350
        %v358 = vpack.c.b16 %v353, %v352
        %v359 = vpack.c.b16 %v355, %v354
        %vm360 = vcmask 64512
        %v362 = vsel %vm360, %v356, 0
        %v365 = vsel %vm360, %v357, 0
        %v368 = vsel %vm360, %v358, 0
        %v371 = vsel %vm360, %v359, 0
        %vm373 = vcmask 1043456
        %v375 = vsel %vm373, %v347, 0
        %377 = vmatpush.bf16.msra.mxu0 0
        %378 = vmatpush.bf16.msra.mxu0 0
        %379 = vmatpush.bf16.msra.mxu0 0
        %380 = vmatpush.bf16.msra.mxu0 0
        %381 = vmatpush.bf16.msra.mxu0 0
        %382 = vmatpush.bf16.msra.mxu0 0
        %383 = vmatpush.bf16.msra.mxu0 0
        %384 = vmatpush.bf16.msra.mxu0 %v375
        %385 = vmatmul.bf16.gmra.mxu0 %v362
        %v386 = vpop.f32.mrf.mxu0
        %v387 = vadd.f32 0.0, %v386
        %v388 = vpop.f32.mrf.mxu0
        %v389 = vadd.f32 0.0, %v388
        %390 = vmatmul.bf16.gmra.mxu0 %v365
        %v391 = vpop.f32.mrf.mxu0
        %v392 = vadd.f32 0.0, %v391
        %v393 = vpop.f32.mrf.mxu0
        %v394 = vadd.f32 0.0, %v393
        %395 = vmatmul.bf16.gmra.mxu0 %v368
        %v396 = vpop.f32.mrf.mxu0
        %v397 = vadd.f32 0.0, %v396
        %v398 = vpop.f32.mrf.mxu0
        %v399 = vadd.f32 0.0, %v398
        %400 = vmatmul.bf16.gmra.mxu0 %v371
        %v401 = vpop.f32.mrf.mxu0
        %v402 = vadd.f32 0.0, %v401
        %v403 = vpop.f32.mrf.mxu0
        %v404 = vadd.f32 0.0, %v403
        %405 = vdwg.mxu0
        %v414 = vunpack.c.l.b16 %v214
        %v415 = vunpack.c.l.b16 %v215
        %v416 = vunpack.c.l.b16 %v216
        %v417 = vunpack.c.l.b16 %v217
        %v418 = vunpack.c.l.b16 %v218
        %v419 = vunpack.c.l.b16 %v219
        %v420 = vunpack.c.l.b16 %v220
        %v421 = vunpack.c.l.b16 %v221
        %v422 = vpack.c.b16 %v415, %v414
        %v423 = vpack.c.b16 %v417, %v416
        %v424 = vpack.c.b16 %v419, %v418
        %v425 = vpack.c.b16 %v421, %v420
        %v427 = vsel %vm360, %v422, 0
        %v430 = vsel %vm360, %v423, 0
        %v433 = vsel %vm360, %v424, 0
        %v436 = vsel %vm360, %v425, 0
        %v439 = vsel %vm373, %v222, 0
        %441 = vmatpush.bf16.msra.mxu0 0
        %442 = vmatpush.bf16.msra.mxu0 0
        %443 = vmatpush.bf16.msra.mxu0 0
        %444 = vmatpush.bf16.msra.mxu0 0
        %445 = vmatpush.bf16.msra.mxu0 0
        %446 = vmatpush.bf16.msra.mxu0 0
        %447 = vmatpush.bf16.msra.mxu0 0
        %448 = vmatpush.bf16.msra.mxu0 %v439
        %449 = vmatmul.bf16.gmra.mxu0 %v427
        %v450 = vpop.f32.mrf.mxu0
        %v451 = vadd.f32 %v387, %v450
        %v452 = vpop.f32.mrf.mxu0
        %v453 = vadd.f32 %v389, %v452
        %454 = vmatmul.bf16.gmra.mxu0 %v430
        %v455 = vpop.f32.mrf.mxu0
        %v456 = vadd.f32 %v392, %v455
        %v457 = vpop.f32.mrf.mxu0
        %v458 = vadd.f32 %v394, %v457
        %459 = vmatmul.bf16.gmra.mxu0 %v433
        %v460 = vpop.f32.mrf.mxu0
        %v461 = vadd.f32 %v397, %v460
        %v462 = vpop.f32.mrf.mxu0
        %v463 = vadd.f32 %v399, %v462
        %464 = vmatmul.bf16.gmra.mxu0 %v436
        %v465 = vpop.f32.mrf.mxu0
        %v466 = vadd.f32 %v402, %v465
        %v467 = vpop.f32.mrf.mxu0
        %v468 = vadd.f32 %v404, %v467
        %469 = vdwg.mxu0
        %s470 = scalar_lea.vmem %s204, 8
        %v471 = vld [vmem:[%s470] sm:$0xf]
        %v472 = vld [vmem:[%s470 + $0x8] sm:$0xf]
        %v473 = vld [vmem:[%s470 + $0x10] sm:$0xf]
        %v474 = vld [vmem:[%s470 + $0x18] sm:$0xf]
        %v475 = vld [vmem:[%s470 + $0x20] sm:$0xf]
        %v476 = vld [vmem:[%s470 + $0x28] sm:$0xf]
        %v477 = vld [vmem:[%s470 + $0x30] sm:$0xf]
        %v478 = vld [vmem:[%s470 + $0x38] sm:$0xf]
        %s479 = scalar_lea.vmem %s1, 8
        %v480 = vld [vmem:[%s479] sm:$0xf]
        %v489 = vunpack.c.l.b16 %v471
        %v490 = vunpack.c.l.b16 %v472
        %v491 = vunpack.c.l.b16 %v473
        %v492 = vunpack.c.l.b16 %v474
        %v493 = vunpack.c.l.b16 %v475
        %v494 = vunpack.c.l.b16 %v476
        %v495 = vunpack.c.l.b16 %v477
        %v496 = vunpack.c.l.b16 %v478
        %v497 = vpack.c.b16 %v490, %v489
        %v498 = vpack.c.b16 %v492, %v491
        %v499 = vpack.c.b16 %v494, %v493
        %v500 = vpack.c.b16 %v496, %v495
        %v502 = vsel %vm360, %v497, 0
        %v505 = vsel %vm360, %v498, 0
        %v508 = vsel %vm360, %v499, 0
        %v511 = vsel %vm360, %v500, 0
        %v514 = vsel %vm373, %v480, 0
        %516 = vmatpush.bf16.msra.mxu0 0
        %517 = vmatpush.bf16.msra.mxu0 0
        %518 = vmatpush.bf16.msra.mxu0 0
        %519 = vmatpush.bf16.msra.mxu0 0
        %520 = vmatpush.bf16.msra.mxu0 0
        %521 = vmatpush.bf16.msra.mxu0 0
        %522 = vmatpush.bf16.msra.mxu0 0
        %523 = vmatpush.bf16.msra.mxu0 %v514
        %524 = vmatmul.bf16.gmra.mxu0 %v502
        %v525 = vpop.f32.mrf.mxu0
        %v526 = vadd.f32 0.0, %v525
        %v527 = vpop.f32.mrf.mxu0
        %v528 = vadd.f32 0.0, %v527
        %529 = vmatmul.bf16.gmra.mxu0 %v505
        %v530 = vpop.f32.mrf.mxu0
        %v531 = vadd.f32 0.0, %v530
        %v532 = vpop.f32.mrf.mxu0
        %v533 = vadd.f32 0.0, %v532
        %534 = vmatmul.bf16.gmra.mxu0 %v508
        %v535 = vpop.f32.mrf.mxu0
        %v536 = vadd.f32 0.0, %v535
        %v537 = vpop.f32.mrf.mxu0
        %v538 = vadd.f32 0.0, %v537
        %539 = vmatmul.bf16.gmra.mxu0 %v511
        %v540 = vpop.f32.mrf.mxu0
        %v541 = vadd.f32 0.0, %v540
        %v542 = vpop.f32.mrf.mxu0
        %v543 = vadd.f32 0.0, %v542
        %544 = vdwg.mxu0
        %v545 = vadd.f32 %v451, %v526
        %v546 = vadd.f32 %v453, %v528
        %v547 = vadd.f32 %v456, %v531
        %v548 = vadd.f32 %v458, %v533
        %v549 = vadd.f32 %v461, %v536
        %v550 = vadd.f32 %v463, %v538
        %v551 = vadd.f32 %v466, %v541
        %v552 = vadd.f32 %v468, %v543
        %v553 = vld [vmem:[%s470] sm:$0xf]
        %v554 = vld [vmem:[%s470 + $0x4] sm:$0x1]
        %v555 = vld [vmem:[%s470 + $0x8] sm:$0xf]
        %v556 = vld [vmem:[%s470 + $0xc] sm:$0x1]
        %v557 = vld [vmem:[%s470 + $0x10] sm:$0xf]
        %v558 = vld [vmem:[%s470 + $0x14] sm:$0x1]
        %v559 = vld [vmem:[%s470 + $0x18] sm:$0xf]
        %v560 = vld [vmem:[%s470 + $0x1c] sm:$0x1]
        %v561 = vld [vmem:[%s470 + $0x20] sm:$0xf]
        %v562 = vld [vmem:[%s470 + $0x24] sm:$0x1]
        %v563 = vld [vmem:[%s470 + $0x28] sm:$0xf]
        %v564 = vld [vmem:[%s470 + $0x2c] sm:$0x1]
        %v565 = vld [vmem:[%s470 + $0x30] sm:$0xf]
        %v566 = vld [vmem:[%s470 + $0x34] sm:$0x1]
        %v567 = vld [vmem:[%s470 + $0x38] sm:$0xf]
        %v568 = vld [vmem:[%s470 + $0x3c] sm:$0x1]
        %v570 = vshrl.u32 %v553, 16
        %v572 = vrot.slane %v570, 4
        %v573 = vshll.u32 %v553, 16
        %v575 = vrot.slane %v573, 5
        %v576 = vor.u32 %v572, %v575
        %v577 = vrot.slane %v576, 4
        %v579 = vshll.u32 %v554, 16
        %v581 = vrot.slane %v579, 5
        %v582 = vsel %vm233, %v577, %v581
        %v584 = vshrl.u32 %v555, 16
        %v586 = vrot.slane %v584, 4
        %v587 = vshll.u32 %v555, 16
        %v589 = vrot.slane %v587, 5
        %v590 = vor.u32 %v586, %v589
        %v591 = vrot.slane %v590, 4
        %v593 = vshll.u32 %v556, 16
        %v595 = vrot.slane %v593, 5
        %v596 = vsel %vm233, %v591, %v595
        %v598 = vshrl.u32 %v557, 16
        %v600 = vrot.slane %v598, 4
        %v601 = vshll.u32 %v557, 16
        %v603 = vrot.slane %v601, 5
        %v604 = vor.u32 %v600, %v603
        %v605 = vrot.slane %v604, 4
        %v607 = vshll.u32 %v558, 16
        %v609 = vrot.slane %v607, 5
        %v610 = vsel %vm233, %v605, %v609
        %v612 = vshrl.u32 %v559, 16
        %v614 = vrot.slane %v612, 4
        %v615 = vshll.u32 %v559, 16
        %v617 = vrot.slane %v615, 5
        %v618 = vor.u32 %v614, %v617
        %v619 = vrot.slane %v618, 4
        %v621 = vshll.u32 %v560, 16
        %v623 = vrot.slane %v621, 5
        %v624 = vsel %vm233, %v619, %v623
        %v626 = vshrl.u32 %v561, 16
        %v628 = vrot.slane %v626, 4
        %v629 = vshll.u32 %v561, 16
        %v631 = vrot.slane %v629, 5
        %v632 = vor.u32 %v628, %v631
        %v633 = vrot.slane %v632, 4
        %v635 = vshll.u32 %v562, 16
        %v637 = vrot.slane %v635, 5
        %v638 = vsel %vm233, %v633, %v637
        %v640 = vshrl.u32 %v563, 16
        %v642 = vrot.slane %v640, 4
        %v643 = vshll.u32 %v563, 16
        %v645 = vrot.slane %v643, 5
        %v646 = vor.u32 %v642, %v645
        %v647 = vrot.slane %v646, 4
        %v649 = vshll.u32 %v564, 16
        %v651 = vrot.slane %v649, 5
        %v652 = vsel %vm233, %v647, %v651
        %v654 = vshrl.u32 %v565, 16
        %v656 = vrot.slane %v654, 4
        %v657 = vshll.u32 %v565, 16
        %v659 = vrot.slane %v657, 5
        %v660 = vor.u32 %v656, %v659
        %v661 = vrot.slane %v660, 4
        %v663 = vshll.u32 %v566, 16
        %v665 = vrot.slane %v663, 5
        %v666 = vsel %vm233, %v661, %v665
        %v668 = vshrl.u32 %v567, 16
        %v670 = vrot.slane %v668, 4
        %v671 = vshll.u32 %v567, 16
        %v673 = vrot.slane %v671, 5
        %v674 = vor.u32 %v670, %v673
        %v675 = vrot.slane %v674, 4
        %v677 = vshll.u32 %v568, 16
        %v679 = vrot.slane %v677, 5
        %v680 = vsel %vm233, %v675, %v679
        %s681 = scalar_lea.vmem %s1, 12
        %v682 = vld [vmem:[%s681] sm:$0xf]
        %v683 = vunpack.c.l.b16 %v582
        %v684 = vunpack.c.l.b16 %v596
        %v685 = vunpack.c.l.b16 %v610
        %v686 = vunpack.c.l.b16 %v624
        %v687 = vunpack.c.l.b16 %v638
        %v688 = vunpack.c.l.b16 %v652
        %v689 = vunpack.c.l.b16 %v666
        %v690 = vunpack.c.l.b16 %v680
        %v691 = vpack.c.b16 %v684, %v683
        %v692 = vpack.c.b16 %v686, %v685
        %v693 = vpack.c.b16 %v688, %v687
        %v694 = vpack.c.b16 %v690, %v689
        %v696 = vsel %vm360, %v691, 0
        %v699 = vsel %vm360, %v692, 0
        %v702 = vsel %vm360, %v693, 0
        %v705 = vsel %vm360, %v694, 0
        %v708 = vsel %vm373, %v682, 0
        %710 = vmatpush.bf16.msra.mxu0 0
        %711 = vmatpush.bf16.msra.mxu0 0
        %712 = vmatpush.bf16.msra.mxu0 0
        %713 = vmatpush.bf16.msra.mxu0 0
        %714 = vmatpush.bf16.msra.mxu0 0
        %715 = vmatpush.bf16.msra.mxu0 0
        %716 = vmatpush.bf16.msra.mxu0 0
        %717 = vmatpush.bf16.msra.mxu0 %v708
        %718 = vmatmul.bf16.gmra.mxu0 %v696
        %v719 = vpop.f32.mrf.mxu0
        %v720 = vadd.f32 0.0, %v719
        %v721 = vpop.f32.mrf.mxu0
        %v722 = vadd.f32 0.0, %v721
        %723 = vmatmul.bf16.gmra.mxu0 %v699
        %v724 = vpop.f32.mrf.mxu0
        %v725 = vadd.f32 0.0, %v724
        %v726 = vpop.f32.mrf.mxu0
        %v727 = vadd.f32 0.0, %v726
        %728 = vmatmul.bf16.gmra.mxu0 %v702
        %v729 = vpop.f32.mrf.mxu0
        %v730 = vadd.f32 0.0, %v729
        %v731 = vpop.f32.mrf.mxu0
        %v732 = vadd.f32 0.0, %v731
        %733 = vmatmul.bf16.gmra.mxu0 %v705
        %v734 = vpop.f32.mrf.mxu0
        %v735 = vadd.f32 0.0, %v734
        %v736 = vpop.f32.mrf.mxu0
        %v737 = vadd.f32 0.0, %v736
        %738 = vdwg.mxu0
        %v739 = vadd.f32 %v545, %v720
        %v740 = vadd.f32 %v546, %v722
        %v741 = vadd.f32 %v547, %v725
        %v742 = vadd.f32 %v548, %v727
        %v743 = vadd.f32 %v549, %v730
        %v744 = vadd.f32 %v550, %v732
        %v745 = vadd.f32 %v551, %v735
        %v746 = vadd.f32 %v552, %v737
        %v747 = vpack.c.bf16 %v739, %v739
        %v748 = vpack.c.bf16 %v740, %v740
        %v749 = vpack.c.bf16 %v741, %v741
        %v750 = vpack.c.bf16 %v742, %v742
        %v751 = vpack.c.bf16 %v743, %v743
        %v752 = vpack.c.bf16 %v744, %v744
        %v753 = vpack.c.bf16 %v745, %v745
        %v754 = vpack.c.bf16 %v746, %v746
        %vm755 = vcmask 60416
        %756 = vst.msk [vmem:[%s187] sm:$0xf] %vm755, %v747
        %757 = vst.msk [vmem:[%s187 + $0x4] sm:$0xf] %vm755, %v748
        %758 = vst.msk [vmem:[%s187 + $0x8] sm:$0xf] %vm755, %v749
        %759 = vst.msk [vmem:[%s187 + $0xc] sm:$0xf] %vm755, %v750
        %760 = vst.msk [vmem:[%s187 + $0x10] sm:$0xf] %vm755, %v751
        %761 = vst.msk [vmem:[%s187 + $0x14] sm:$0xf] %vm755, %v752
        %762 = vst.msk [vmem:[%s187 + $0x18] sm:$0xf] %vm755, %v753
        %763 = vst.msk [vmem:[%s187 + $0x1c] sm:$0xf] %vm755, %v754
        %v764 = vsel %vm360, %v739, 0.0
        %v765 = vsel %vm360, %v740, 0.0
        %v766 = vadd.f32 %v764, %v765
        %v767 = vsel %vm360, %v741, 0.0
        %v768 = vadd.f32 %v766, %v767
        %v769 = vsel %vm360, %v742, 0.0
        %v770 = vadd.f32 %v768, %v769
        %v771 = vsel %vm360, %v743, 0.0
        %v772 = vadd.f32 %v770, %v771
        %v773 = vsel %vm360, %v744, 0.0
        %v774 = vadd.f32 %v772, %v773
        %v775 = vsel %vm360, %v745, 0.0
        %v776 = vadd.f32 %v774, %v775
        %v777 = vsel %vm360, %v746, 0.0
        %v778 = vadd.f32 %v776, %v777
        %v779 = vadd.f32 %v778, 0.0
        %v780 = vmul.f32 %v739, %v739
        %v781 = vmul.f32 %v740, %v740
        %v782 = vmul.f32 %v741, %v741
        %v783 = vmul.f32 %v742, %v742
        %v784 = vmul.f32 %v743, %v743
        %v785 = vmul.f32 %v744, %v744
        %v786 = vmul.f32 %v745, %v745
        %v787 = vmul.f32 %v746, %v746
        %v788 = vsel %vm360, %v780, 0.0
        %v789 = vsel %vm360, %v781, 0.0
        %v790 = vadd.f32 %v788, %v789
        %v791 = vsel %vm360, %v782, 0.0
        %v792 = vadd.f32 %v790, %v791
        %v793 = vsel %vm360, %v783, 0.0
        %v794 = vadd.f32 %v792, %v793
        %v795 = vsel %vm360, %v784, 0.0
        %v796 = vadd.f32 %v794, %v795
        %v797 = vsel %vm360, %v785, 0.0
        %v798 = vadd.f32 %v796, %v797
        %v799 = vsel %vm360, %v786, 0.0
        %v800 = vadd.f32 %v798, %v799
        %v801 = vsel %vm360, %v787, 0.0
        %v802 = vadd.f32 %v800, %v801
        %v803 = vadd.f32 %v802, 0.0
        %v804 = vld [vmem:[%s204] sm:$0xf]
        %v805 = vld [vmem:[%s204 + $0x4] sm:$0x1]
        %v806 = vld [vmem:[%s204 + $0x8] sm:$0xf]
        %v807 = vld [vmem:[%s204 + $0xc] sm:$0x1]
        %v808 = vld [vmem:[%s204 + $0x10] sm:$0xf]
        %v809 = vld [vmem:[%s204 + $0x14] sm:$0x1]
        %v810 = vld [vmem:[%s204 + $0x18] sm:$0xf]
        %v811 = vld [vmem:[%s204 + $0x1c] sm:$0x1]
        %v812 = vld [vmem:[%s204 + $0x20] sm:$0xf]
        %v813 = vld [vmem:[%s204 + $0x24] sm:$0x1]
        %v814 = vld [vmem:[%s204 + $0x28] sm:$0xf]
        %v815 = vld [vmem:[%s204 + $0x2c] sm:$0x1]
        %v816 = vld [vmem:[%s204 + $0x30] sm:$0xf]
        %v817 = vld [vmem:[%s204 + $0x34] sm:$0x1]
        %v818 = vld [vmem:[%s204 + $0x38] sm:$0xf]
        %v819 = vld [vmem:[%s204 + $0x3c] sm:$0x1]
        %v821 = vshrl.u32 %v804, 16
        %v823 = vrot.slane %v821, 4
        %v824 = vshll.u32 %v804, 16
        %v826 = vrot.slane %v824, 5
        %v827 = vor.u32 %v823, %v826
        %v828 = vrot.slane %v827, 4
        %v830 = vshll.u32 %v805, 16
        %v832 = vrot.slane %v830, 5
        %v833 = vsel %vm233, %v828, %v832
        %v835 = vshrl.u32 %v806, 16
        %v837 = vrot.slane %v835, 4
        %v838 = vshll.u32 %v806, 16
        %v840 = vrot.slane %v838, 5
        %v841 = vor.u32 %v837, %v840
        %v842 = vrot.slane %v841, 4
        %v844 = vshll.u32 %v807, 16
        %v846 = vrot.slane %v844, 5
        %v847 = vsel %vm233, %v842, %v846
        %v849 = vshrl.u32 %v808, 16
        %v851 = vrot.slane %v849, 4
        %v852 = vshll.u32 %v808, 16
        %v854 = vrot.slane %v852, 5
        %v855 = vor.u32 %v851, %v854
        %v856 = vrot.slane %v855, 4
        %v858 = vshll.u32 %v809, 16
        %v860 = vrot.slane %v858, 5
        %v861 = vsel %vm233, %v856, %v860
        %v863 = vshrl.u32 %v810, 16
        %v865 = vrot.slane %v863, 4
        %v866 = vshll.u32 %v810, 16
        %v868 = vrot.slane %v866, 5
        %v869 = vor.u32 %v865, %v868
        %v870 = vrot.slane %v869, 4
        %v872 = vshll.u32 %v811, 16
        %v874 = vrot.slane %v872, 5
        %v875 = vsel %vm233, %v870, %v874
        %v877 = vshrl.u32 %v812, 16
        %v879 = vrot.slane %v877, 4
        %v880 = vshll.u32 %v812, 16
        %v882 = vrot.slane %v880, 5
        %v883 = vor.u32 %v879, %v882
        %v884 = vrot.slane %v883, 4
        %v886 = vshll.u32 %v813, 16
        %v888 = vrot.slane %v886, 5
        %v889 = vsel %vm233, %v884, %v888
        %v891 = vshrl.u32 %v814, 16
        %v893 = vrot.slane %v891, 4
        %v894 = vshll.u32 %v814, 16
        %v896 = vrot.slane %v894, 5
        %v897 = vor.u32 %v893, %v896
        %v898 = vrot.slane %v897, 4
        %v900 = vshll.u32 %v815, 16
        %v902 = vrot.slane %v900, 5
        %v903 = vsel %vm233, %v898, %v902
        %v905 = vshrl.u32 %v816, 16
        %v907 = vrot.slane %v905, 4
        %v908 = vshll.u32 %v816, 16
        %v910 = vrot.slane %v908, 5
        %v911 = vor.u32 %v907, %v910
        %v912 = vrot.slane %v911, 4
        %v914 = vshll.u32 %v817, 16
        %v916 = vrot.slane %v914, 5
        %v917 = vsel %vm233, %v912, %v916
        %v919 = vshrl.u32 %v818, 16
        %v921 = vrot.slane %v919, 4
        %v922 = vshll.u32 %v818, 16
        %v924 = vrot.slane %v922, 5
        %v925 = vor.u32 %v921, %v924
        %v926 = vrot.slane %v925, 4
        %v928 = vshll.u32 %v819, 16
        %v930 = vrot.slane %v928, 5
        %v931 = vsel %vm233, %v926, %v930
        %s932 = scalar_lea.vmem %s1, 16
        %v933 = vld [vmem:[%s932] sm:$0xf]
        %v934 = vld [vmem:[%s204] sm:$0xe]
        %v935 = vld [vmem:[%s204 + $0x8] sm:$0xe]
        %v936 = vld [vmem:[%s204 + $0x10] sm:$0xe]
        %v937 = vld [vmem:[%s204 + $0x18] sm:$0xe]
        %v938 = vld [vmem:[%s204 + $0x20] sm:$0xe]
        %v939 = vld [vmem:[%s204 + $0x28] sm:$0xe]
        %v940 = vld [vmem:[%s204 + $0x30] sm:$0xe]
        %v941 = vld [vmem:[%s204 + $0x38] sm:$0xe]
        %vm958 = vcmask 1042432
        %vm959 = vcmask 1046532
        %vm960 = vmor %vm958, %vm959
        %v961 = vrot.slane %v934, 5
        %v962 = vrot.slane %v961, 4
        %v963 = vrot.slane %v805, 5
        %v964 = vsel %vm960, %v962, %v963
        %v965 = vrot.slane %v935, 5
        %v966 = vrot.slane %v965, 4
        %v967 = vrot.slane %v807, 5
        %v968 = vsel %vm960, %v966, %v967
        %v969 = vrot.slane %v936, 5
        %v970 = vrot.slane %v969, 4
        %v971 = vrot.slane %v809, 5
        %v972 = vsel %vm960, %v970, %v971
        %v973 = vrot.slane %v937, 5
        %v974 = vrot.slane %v973, 4
        %v975 = vrot.slane %v811, 5
        %v976 = vsel %vm960, %v974, %v975
        %v977 = vrot.slane %v938, 5
        %v978 = vrot.slane %v977, 4
        %v979 = vrot.slane %v813, 5
        %v980 = vsel %vm960, %v978, %v979
        %v981 = vrot.slane %v939, 5
        %v982 = vrot.slane %v981, 4
        %v983 = vrot.slane %v815, 5
        %v984 = vsel %vm960, %v982, %v983
        %v985 = vrot.slane %v940, 5
        %v986 = vrot.slane %v985, 4
        %v987 = vrot.slane %v817, 5
        %v988 = vsel %vm960, %v986, %v987
        %v989 = vrot.slane %v941, 5
        %v990 = vrot.slane %v989, 4
        %v991 = vrot.slane %v819, 5
        %v992 = vsel %vm960, %v990, %v991
        %s993 = scalar_lea.vmem %s1, 20
        %v994 = vld [vmem:[%s993] sm:$0xf]
        %v995 = vunpack.c.l.b16 %v964
        %v996 = vunpack.c.l.b16 %v968
        %v997 = vunpack.c.l.b16 %v972
        %v998 = vunpack.c.l.b16 %v976
        %v999 = vunpack.c.l.b16 %v980
        %v1000 = vunpack.c.l.b16 %v984
        %v1001 = vunpack.c.l.b16 %v988
        %v1002 = vunpack.c.l.b16 %v992
        %v1003 = vpack.c.b16 %v996, %v995
        %v1004 = vpack.c.b16 %v998, %v997
        %v1005 = vpack.c.b16 %v1000, %v999
        %v1006 = vpack.c.b16 %v1002, %v1001
        %v1008 = vsel %vm360, %v1003, 0
        %v1011 = vsel %vm360, %v1004, 0
        %v1014 = vsel %vm360, %v1005, 0
        %v1017 = vsel %vm360, %v1006, 0
        %v1020 = vsel %vm373, %v994, 0
        %1022 = vmatpush.bf16.msra.mxu0 0
        %1023 = vmatpush.bf16.msra.mxu0 0
        %1024 = vmatpush.bf16.msra.mxu0 0
        %1025 = vmatpush.bf16.msra.mxu0 0
        %1026 = vmatpush.bf16.msra.mxu0 0
        %1027 = vmatpush.bf16.msra.mxu0 0
        %1028 = vmatpush.bf16.msra.mxu0 0
        %1029 = vmatpush.bf16.msra.mxu0 %v1020
        %1030 = vmatmul.bf16.gmra.mxu0 %v1008
        %v1031 = vpop.f32.mrf.mxu0
        %v1032 = vadd.f32 0.0, %v1031
        %v1033 = vpop.f32.mrf.mxu0
        %v1034 = vadd.f32 0.0, %v1033
        %1035 = vmatmul.bf16.gmra.mxu0 %v1011
        %v1036 = vpop.f32.mrf.mxu0
        %v1037 = vadd.f32 0.0, %v1036
        %v1038 = vpop.f32.mrf.mxu0
        %v1039 = vadd.f32 0.0, %v1038
        %1040 = vmatmul.bf16.gmra.mxu0 %v1014
        %v1041 = vpop.f32.mrf.mxu0
        %v1042 = vadd.f32 0.0, %v1041
        %v1043 = vpop.f32.mrf.mxu0
        %v1044 = vadd.f32 0.0, %v1043
        %1045 = vmatmul.bf16.gmra.mxu0 %v1017
        %v1046 = vpop.f32.mrf.mxu0
        %v1047 = vadd.f32 0.0, %v1046
        %v1048 = vpop.f32.mrf.mxu0
        %v1049 = vadd.f32 0.0, %v1048
        %1050 = vdwg.mxu0
        %v1051 = vunpack.c.l.b16 %v833
        %v1052 = vunpack.c.l.b16 %v847
        %v1053 = vunpack.c.l.b16 %v861
        %v1054 = vunpack.c.l.b16 %v875
        %v1055 = vunpack.c.l.b16 %v889
        %v1056 = vunpack.c.l.b16 %v903
        %v1057 = vunpack.c.l.b16 %v917
        %v1058 = vunpack.c.l.b16 %v931
        %v1059 = vpack.c.b16 %v1052, %v1051
        %v1060 = vpack.c.b16 %v1054, %v1053
        %v1061 = vpack.c.b16 %v1056, %v1055
        %v1062 = vpack.c.b16 %v1058, %v1057
        %v1064 = vsel %vm360, %v1059, 0
        %v1067 = vsel %vm360, %v1060, 0
        %v1070 = vsel %vm360, %v1061, 0
        %v1073 = vsel %vm360, %v1062, 0
        %v1076 = vsel %vm373, %v933, 0
        %1078 = vmatpush.bf16.msra.mxu0 0
        %1079 = vmatpush.bf16.msra.mxu0 0
        %1080 = vmatpush.bf16.msra.mxu0 0
        %1081 = vmatpush.bf16.msra.mxu0 0
        %1082 = vmatpush.bf16.msra.mxu0 0
        %1083 = vmatpush.bf16.msra.mxu0 0
        %1084 = vmatpush.bf16.msra.mxu0 0
        %1085 = vmatpush.bf16.msra.mxu0 %v1076
        %1086 = vmatmul.bf16.gmra.mxu0 %v1064
        %v1087 = vpop.f32.mrf.mxu0
        %v1088 = vadd.f32 %v1032, %v1087
        %v1089 = vpop.f32.mrf.mxu0
        %v1090 = vadd.f32 %v1034, %v1089
        %1091 = vmatmul.bf16.gmra.mxu0 %v1067
        %v1092 = vpop.f32.mrf.mxu0
        %v1093 = vadd.f32 %v1037, %v1092
        %v1094 = vpop.f32.mrf.mxu0
        %v1095 = vadd.f32 %v1039, %v1094
        %1096 = vmatmul.bf16.gmra.mxu0 %v1070
        %v1097 = vpop.f32.mrf.mxu0
        %v1098 = vadd.f32 %v1042, %v1097
        %v1099 = vpop.f32.mrf.mxu0
        %v1100 = vadd.f32 %v1044, %v1099
        %1101 = vmatmul.bf16.gmra.mxu0 %v1073
        %v1102 = vpop.f32.mrf.mxu0
        %v1103 = vadd.f32 %v1047, %v1102
        %v1104 = vpop.f32.mrf.mxu0
        %v1105 = vadd.f32 %v1049, %v1104
        %1106 = vdwg.mxu0
        %v1107 = vld [vmem:[%s470] sm:$0xf]
        %v1108 = vld [vmem:[%s470 + $0x4] sm:$0x1]
        %v1109 = vld [vmem:[%s470 + $0x8] sm:$0xf]
        %v1110 = vld [vmem:[%s470 + $0xc] sm:$0x1]
        %v1111 = vld [vmem:[%s470 + $0x10] sm:$0xf]
        %v1112 = vld [vmem:[%s470 + $0x14] sm:$0x1]
        %v1113 = vld [vmem:[%s470 + $0x18] sm:$0xf]
        %v1114 = vld [vmem:[%s470 + $0x1c] sm:$0x1]
        %v1115 = vld [vmem:[%s470 + $0x20] sm:$0xf]
        %v1116 = vld [vmem:[%s470 + $0x24] sm:$0x1]
        %v1117 = vld [vmem:[%s470 + $0x28] sm:$0xf]
        %v1118 = vld [vmem:[%s470 + $0x2c] sm:$0x1]
        %v1119 = vld [vmem:[%s470 + $0x30] sm:$0xf]
        %v1120 = vld [vmem:[%s470 + $0x34] sm:$0x1]
        %v1121 = vld [vmem:[%s470 + $0x38] sm:$0xf]
        %v1122 = vld [vmem:[%s470 + $0x3c] sm:$0x1]
        %v1124 = vshrl.u32 %v1107, 16
        %v1126 = vrot.slane %v1124, 4
        %v1127 = vshll.u32 %v1107, 16
        %v1129 = vrot.slane %v1127, 5
        %v1130 = vor.u32 %v1126, %v1129
        %v1131 = vrot.slane %v1130, 4
        %v1133 = vshll.u32 %v1108, 16
        %v1135 = vrot.slane %v1133, 5
        %v1136 = vsel %vm233, %v1131, %v1135
        %v1138 = vshrl.u32 %v1109, 16
        %v1140 = vrot.slane %v1138, 4
        %v1141 = vshll.u32 %v1109, 16
        %v1143 = vrot.slane %v1141, 5
        %v1144 = vor.u32 %v1140, %v1143
        %v1145 = vrot.slane %v1144, 4
        %v1147 = vshll.u32 %v1110, 16
        %v1149 = vrot.slane %v1147, 5
        %v1150 = vsel %vm233, %v1145, %v1149
        %v1152 = vshrl.u32 %v1111, 16
        %v1154 = vrot.slane %v1152, 4
        %v1155 = vshll.u32 %v1111, 16
        %v1157 = vrot.slane %v1155, 5
        %v1158 = vor.u32 %v1154, %v1157
        %v1159 = vrot.slane %v1158, 4
        %v1161 = vshll.u32 %v1112, 16
        %v1163 = vrot.slane %v1161, 5
        %v1164 = vsel %vm233, %v1159, %v1163
        %v1166 = vshrl.u32 %v1113, 16
        %v1168 = vrot.slane %v1166, 4
        %v1169 = vshll.u32 %v1113, 16
        %v1171 = vrot.slane %v1169, 5
        %v1172 = vor.u32 %v1168, %v1171
        %v1173 = vrot.slane %v1172, 4
        %v1175 = vshll.u32 %v1114, 16
        %v1177 = vrot.slane %v1175, 5
        %v1178 = vsel %vm233, %v1173, %v1177
        %v1180 = vshrl.u32 %v1115, 16
        %v1182 = vrot.slane %v1180, 4
        %v1183 = vshll.u32 %v1115, 16
        %v1185 = vrot.slane %v1183, 5
        %v1186 = vor.u32 %v1182, %v1185
        %v1187 = vrot.slane %v1186, 4
        %v1189 = vshll.u32 %v1116, 16
        %v1191 = vrot.slane %v1189, 5
        %v1192 = vsel %vm233, %v1187, %v1191
        %v1194 = vshrl.u32 %v1117, 16
        %v1196 = vrot.slane %v1194, 4
        %v1197 = vshll.u32 %v1117, 16
        %v1199 = vrot.slane %v1197, 5
        %v1200 = vor.u32 %v1196, %v1199
        %v1201 = vrot.slane %v1200, 4
        %v1203 = vshll.u32 %v1118, 16
        %v1205 = vrot.slane %v1203, 5
        %v1206 = vsel %vm233, %v1201, %v1205
        %v1208 = vshrl.u32 %v1119, 16
        %v1210 = vrot.slane %v1208, 4
        %v1211 = vshll.u32 %v1119, 16
        %v1213 = vrot.slane %v1211, 5
        %v1214 = vor.u32 %v1210, %v1213
        %v1215 = vrot.slane %v1214, 4
        %v1217 = vshll.u32 %v1120, 16
        %v1219 = vrot.slane %v1217, 5
        %v1220 = vsel %vm233, %v1215, %v1219
        %v1222 = vshrl.u32 %v1121, 16
        %v1224 = vrot.slane %v1222, 4
        %v1225 = vshll.u32 %v1121, 16
        %v1227 = vrot.slane %v1225, 5
        %v1228 = vor.u32 %v1224, %v1227
        %v1229 = vrot.slane %v1228, 4
        %v1231 = vshll.u32 %v1122, 16
        %v1233 = vrot.slane %v1231, 5
        %v1234 = vsel %vm233, %v1229, %v1233
        %s1235 = scalar_lea.vmem %s1, 24
        %v1236 = vld [vmem:[%s1235] sm:$0xf]
        %v1237 = vunpack.c.l.b16 %v1136
        %v1238 = vunpack.c.l.b16 %v1150
        %v1239 = vunpack.c.l.b16 %v1164
        %v1240 = vunpack.c.l.b16 %v1178
        %v1241 = vunpack.c.l.b16 %v1192
        %v1242 = vunpack.c.l.b16 %v1206
        %v1243 = vunpack.c.l.b16 %v1220
        %v1244 = vunpack.c.l.b16 %v1234
        %v1245 = vpack.c.b16 %v1238, %v1237
        %v1246 = vpack.c.b16 %v1240, %v1239
        %v1247 = vpack.c.b16 %v1242, %v1241
        %v1248 = vpack.c.b16 %v1244, %v1243
        %v1250 = vsel %vm360, %v1245, 0
        %v1253 = vsel %vm360, %v1246, 0
        %v1256 = vsel %vm360, %v1247, 0
        %v1259 = vsel %vm360, %v1248, 0
        %v1262 = vsel %vm373, %v1236, 0
        %1264 = vmatpush.bf16.msra.mxu0 0
        %1265 = vmatpush.bf16.msra.mxu0 0
        %1266 = vmatpush.bf16.msra.mxu0 0
        %1267 = vmatpush.bf16.msra.mxu0 0
        %1268 = vmatpush.bf16.msra.mxu0 0
        %1269 = vmatpush.bf16.msra.mxu0 0
        %1270 = vmatpush.bf16.msra.mxu0 0
        %1271 = vmatpush.bf16.msra.mxu0 %v1262
        %1272 = vmatmul.bf16.gmra.mxu0 %v1250
        %v1273 = vpop.f32.mrf.mxu0
        %v1274 = vadd.f32 0.0, %v1273
        %v1275 = vpop.f32.mrf.mxu0
        %v1276 = vadd.f32 0.0, %v1275
        %1277 = vmatmul.bf16.gmra.mxu0 %v1253
        %v1278 = vpop.f32.mrf.mxu0
        %v1279 = vadd.f32 0.0, %v1278
        %v1280 = vpop.f32.mrf.mxu0
        %v1281 = vadd.f32 0.0, %v1280
        %1282 = vmatmul.bf16.gmra.mxu0 %v1256
        %v1283 = vpop.f32.mrf.mxu0
        %v1284 = vadd.f32 0.0, %v1283
        %v1285 = vpop.f32.mrf.mxu0
        %v1286 = vadd.f32 0.0, %v1285
        %1287 = vmatmul.bf16.gmra.mxu0 %v1259
        %v1288 = vpop.f32.mrf.mxu0
        %v1289 = vadd.f32 0.0, %v1288
        %v1290 = vpop.f32.mrf.mxu0
        %v1291 = vadd.f32 0.0, %v1290
        %1292 = vdwg.mxu0
        %v1293 = vadd.f32 %v1088, %v1274
        %v1294 = vadd.f32 %v1090, %v1276
        %v1295 = vadd.f32 %v1093, %v1279
        %v1296 = vadd.f32 %v1095, %v1281
        %v1297 = vadd.f32 %v1098, %v1284
        %v1298 = vadd.f32 %v1100, %v1286
        %v1299 = vadd.f32 %v1103, %v1289
        %v1300 = vadd.f32 %v1105, %v1291
        %v1301 = vld [vmem:[%s470] sm:$0xe]
        %v1302 = vld [vmem:[%s470 + $0x8] sm:$0xe]
        %v1303 = vld [vmem:[%s470 + $0x10] sm:$0xe]
        %v1304 = vld [vmem:[%s470 + $0x18] sm:$0xe]
        %v1305 = vld [vmem:[%s470 + $0x20] sm:$0xe]
        %v1306 = vld [vmem:[%s470 + $0x28] sm:$0xe]
        %v1307 = vld [vmem:[%s470 + $0x30] sm:$0xe]
        %v1308 = vld [vmem:[%s470 + $0x38] sm:$0xe]
        %v1325 = vrot.slane %v1301, 5
        %v1326 = vrot.slane %v1325, 4
        %v1327 = vrot.slane %v1108, 5
        %v1328 = vsel %vm960, %v1326, %v1327
        %v1329 = vrot.slane %v1302, 5
        %v1330 = vrot.slane %v1329, 4
        %v1331 = vrot.slane %v1110, 5
        %v1332 = vsel %vm960, %v1330, %v1331
        %v1333 = vrot.slane %v1303, 5
        %v1334 = vrot.slane %v1333, 4
        %v1335 = vrot.slane %v1112, 5
        %v1336 = vsel %vm960, %v1334, %v1335
        %v1337 = vrot.slane %v1304, 5
        %v1338 = vrot.slane %v1337, 4
        %v1339 = vrot.slane %v1114, 5
        %v1340 = vsel %vm960, %v1338, %v1339
        %v1341 = vrot.slane %v1305, 5
        %v1342 = vrot.slane %v1341, 4
        %v1343 = vrot.slane %v1116, 5
        %v1344 = vsel %vm960, %v1342, %v1343
        %v1345 = vrot.slane %v1306, 5
        %v1346 = vrot.slane %v1345, 4
        %v1347 = vrot.slane %v1118, 5
        %v1348 = vsel %vm960, %v1346, %v1347
        %v1349 = vrot.slane %v1307, 5
        %v1350 = vrot.slane %v1349, 4
        %v1351 = vrot.slane %v1120, 5
        %v1352 = vsel %vm960, %v1350, %v1351
        %v1353 = vrot.slane %v1308, 5
        %v1354 = vrot.slane %v1353, 4
        %v1355 = vrot.slane %v1122, 5
        %v1356 = vsel %vm960, %v1354, %v1355
        %s1357 = scalar_lea.vmem %s1, 28
        %v1358 = vld [vmem:[%s1357] sm:$0xf]
        %v1359 = vunpack.c.l.b16 %v1328
        %v1360 = vunpack.c.l.b16 %v1332
        %v1361 = vunpack.c.l.b16 %v1336
        %v1362 = vunpack.c.l.b16 %v1340
        %v1363 = vunpack.c.l.b16 %v1344
        %v1364 = vunpack.c.l.b16 %v1348
        %v1365 = vunpack.c.l.b16 %v1352
        %v1366 = vunpack.c.l.b16 %v1356
        %v1367 = vpack.c.b16 %v1360, %v1359
        %v1368 = vpack.c.b16 %v1362, %v1361
        %v1369 = vpack.c.b16 %v1364, %v1363
        %v1370 = vpack.c.b16 %v1366, %v1365
        %v1372 = vsel %vm360, %v1367, 0
        %v1375 = vsel %vm360, %v1368, 0
        %v1378 = vsel %vm360, %v1369, 0
        %v1381 = vsel %vm360, %v1370, 0
        %v1384 = vsel %vm373, %v1358, 0
        %1386 = vmatpush.bf16.msra.mxu0 0
        %1387 = vmatpush.bf16.msra.mxu0 0
        %1388 = vmatpush.bf16.msra.mxu0 0
        %1389 = vmatpush.bf16.msra.mxu0 0
        %1390 = vmatpush.bf16.msra.mxu0 0
        %1391 = vmatpush.bf16.msra.mxu0 0
        %1392 = vmatpush.bf16.msra.mxu0 0
        %1393 = vmatpush.bf16.msra.mxu0 %v1384
        %1394 = vmatmul.bf16.gmra.mxu0 %v1372
        %v1395 = vpop.f32.mrf.mxu0
        %v1396 = vadd.f32 0.0, %v1395
        %v1397 = vpop.f32.mrf.mxu0
        %v1398 = vadd.f32 0.0, %v1397
        %1399 = vmatmul.bf16.gmra.mxu0 %v1375
        %v1400 = vpop.f32.mrf.mxu0
        %v1401 = vadd.f32 0.0, %v1400
        %v1402 = vpop.f32.mrf.mxu0
        %v1403 = vadd.f32 0.0, %v1402
        %1404 = vmatmul.bf16.gmra.mxu0 %v1378
        %v1405 = vpop.f32.mrf.mxu0
        %v1406 = vadd.f32 0.0, %v1405
        %v1407 = vpop.f32.mrf.mxu0
        %v1408 = vadd.f32 0.0, %v1407
        %1409 = vmatmul.bf16.gmra.mxu0 %v1381
        %v1410 = vpop.f32.mrf.mxu0
        %v1411 = vadd.f32 0.0, %v1410
        %v1412 = vpop.f32.mrf.mxu0
        %v1413 = vadd.f32 0.0, %v1412
        %1414 = vdwg.mxu0
        %v1415 = vadd.f32 %v1293, %v1396
        %v1416 = vadd.f32 %v1294, %v1398
        %v1417 = vadd.f32 %v1295, %v1401
        %v1418 = vadd.f32 %v1296, %v1403
        %v1419 = vadd.f32 %v1297, %v1406
        %v1420 = vadd.f32 %v1298, %v1408
        %v1421 = vadd.f32 %v1299, %v1411
        %v1422 = vadd.f32 %v1300, %v1413
        %v1423 = vpack.c.bf16 %v1415, %v1415
        %v1424 = vpack.c.bf16 %v1416, %v1416
        %v1425 = vpack.c.bf16 %v1417, %v1417
        %v1426 = vpack.c.bf16 %v1418, %v1418
        %v1427 = vpack.c.bf16 %v1419, %v1419
        %v1428 = vpack.c.bf16 %v1420, %v1420
        %v1429 = vpack.c.bf16 %v1421, %v1421
        %v1430 = vpack.c.bf16 %v1422, %v1422
        %s1431 = scalar_lea.vmem %s187, 32 [#allocation2]
        %1432 = vst.msk [vmem:[%s1431] sm:$0xf] %vm755, %v1423
        %1433 = vst.msk [vmem:[%s1431 + $0x4] sm:$0xf] %vm755, %v1424
        %1434 = vst.msk [vmem:[%s1431 + $0x8] sm:$0xf] %vm755, %v1425
        %1435 = vst.msk [vmem:[%s1431 + $0xc] sm:$0xf] %vm755, %v1426
        %1436 = vst.msk [vmem:[%s1431 + $0x10] sm:$0xf] %vm755, %v1427
        %1437 = vst.msk [vmem:[%s1431 + $0x14] sm:$0xf] %vm755, %v1428
        %1438 = vst.msk [vmem:[%s1431 + $0x18] sm:$0xf] %vm755, %v1429
        %1439 = vst.msk [vmem:[%s1431 + $0x1c] sm:$0xf] %vm755, %v1430
        %v1440 = vsel %vm360, %v1415, 0.0
        %v1441 = vsel %vm360, %v1416, 0.0
        %v1442 = vadd.f32 %v1440, %v1441
        %v1443 = vsel %vm360, %v1417, 0.0
        %v1444 = vadd.f32 %v1442, %v1443
        %v1445 = vsel %vm360, %v1418, 0.0
        %v1446 = vadd.f32 %v1444, %v1445
        %v1447 = vsel %vm360, %v1419, 0.0
        %v1448 = vadd.f32 %v1446, %v1447
        %v1449 = vsel %vm360, %v1420, 0.0
        %v1450 = vadd.f32 %v1448, %v1449
        %v1451 = vsel %vm360, %v1421, 0.0
        %v1452 = vadd.f32 %v1450, %v1451
        %v1453 = vsel %vm360, %v1422, 0.0
        %v1454 = vadd.f32 %v1452, %v1453
        %v1455 = vadd.f32 %v779, %v1454
        %v1456 = vmul.f32 %v1415, %v1415
        %v1457 = vmul.f32 %v1416, %v1416
        %v1458 = vmul.f32 %v1417, %v1417
        %v1459 = vmul.f32 %v1418, %v1418
        %v1460 = vmul.f32 %v1419, %v1419
        %v1461 = vmul.f32 %v1420, %v1420
        %v1462 = vmul.f32 %v1421, %v1421
        %v1463 = vmul.f32 %v1422, %v1422
        %v1464 = vsel %vm360, %v1456, 0.0
        %v1465 = vsel %vm360, %v1457, 0.0
        %v1466 = vadd.f32 %v1464, %v1465
        %v1467 = vsel %vm360, %v1458, 0.0
        %v1468 = vadd.f32 %v1466, %v1467
        %v1469 = vsel %vm360, %v1459, 0.0
        %v1470 = vadd.f32 %v1468, %v1469
        %v1471 = vsel %vm360, %v1460, 0.0
        %v1472 = vadd.f32 %v1470, %v1471
        %v1473 = vsel %vm360, %v1461, 0.0
        %v1474 = vadd.f32 %v1472, %v1473
        %v1475 = vsel %vm360, %v1462, 0.0
        %v1476 = vadd.f32 %v1474, %v1475
        %v1477 = vsel %vm360, %v1463, 0.0
        %v1478 = vadd.f32 %v1476, %v1477
        %v1479 = vadd.f32 %v803, %v1478
        %v1480 = vld [vmem:[%s470] sm:$0xf]
        %v1481 = vld [vmem:[%s470 + $0x8] sm:$0xf]
        %v1482 = vld [vmem:[%s470 + $0x10] sm:$0xf]
        %v1483 = vld [vmem:[%s470 + $0x18] sm:$0xf]
        %v1484 = vld [vmem:[%s470 + $0x20] sm:$0xf]
        %v1485 = vld [vmem:[%s470 + $0x28] sm:$0xf]
        %v1486 = vld [vmem:[%s470 + $0x30] sm:$0xf]
        %v1487 = vld [vmem:[%s470 + $0x38] sm:$0xf]
        %s1488 = scalar_lea.vmem %s1, 32
        %v1489 = vld [vmem:[%s1488] sm:$0xf]
        %v1490 = vld [vmem:[%s470 + $0x4] sm:$0x1]
        %v1491 = vld [vmem:[%s470 + $0xc] sm:$0x1]
        %v1492 = vld [vmem:[%s470 + $0x14] sm:$0x1]
        %v1493 = vld [vmem:[%s470 + $0x1c] sm:$0x1]
        %v1494 = vld [vmem:[%s470 + $0x24] sm:$0x1]
        %v1495 = vld [vmem:[%s470 + $0x2c] sm:$0x1]
        %v1496 = vld [vmem:[%s470 + $0x34] sm:$0x1]
        %v1497 = vld [vmem:[%s470 + $0x3c] sm:$0x1]
        %v1499 = vshrl.u32 %v1480, 16
        %v1501 = vrot.slane %v1499, 4
        %v1502 = vshll.u32 %v1480, 16
        %v1504 = vrot.slane %v1502, 5
        %v1505 = vor.u32 %v1501, %v1504
        %v1506 = vrot.slane %v1505, 4
        %v1508 = vshll.u32 %v1490, 16
        %v1510 = vrot.slane %v1508, 5
        %v1511 = vsel %vm233, %v1506, %v1510
        %v1513 = vshrl.u32 %v1481, 16
        %v1515 = vrot.slane %v1513, 4
        %v1516 = vshll.u32 %v1481, 16
        %v1518 = vrot.slane %v1516, 5
        %v1519 = vor.u32 %v1515, %v1518
        %v1520 = vrot.slane %v1519, 4
        %v1522 = vshll.u32 %v1491, 16
        %v1524 = vrot.slane %v1522, 5
        %v1525 = vsel %vm233, %v1520, %v1524
        %v1527 = vshrl.u32 %v1482, 16
        %v1529 = vrot.slane %v1527, 4
        %v1530 = vshll.u32 %v1482, 16
        %v1532 = vrot.slane %v1530, 5
        %v1533 = vor.u32 %v1529, %v1532
        %v1534 = vrot.slane %v1533, 4
        %v1536 = vshll.u32 %v1492, 16
        %v1538 = vrot.slane %v1536, 5
        %v1539 = vsel %vm233, %v1534, %v1538
        %v1541 = vshrl.u32 %v1483, 16
        %v1543 = vrot.slane %v1541, 4
        %v1544 = vshll.u32 %v1483, 16
        %v1546 = vrot.slane %v1544, 5
        %v1547 = vor.u32 %v1543, %v1546
        %v1548 = vrot.slane %v1547, 4
        %v1550 = vshll.u32 %v1493, 16
        %v1552 = vrot.slane %v1550, 5
        %v1553 = vsel %vm233, %v1548, %v1552
        %v1555 = vshrl.u32 %v1484, 16
        %v1557 = vrot.slane %v1555, 4
        %v1558 = vshll.u32 %v1484, 16
        %v1560 = vrot.slane %v1558, 5
        %v1561 = vor.u32 %v1557, %v1560
        %v1562 = vrot.slane %v1561, 4
        %v1564 = vshll.u32 %v1494, 16
        %v1566 = vrot.slane %v1564, 5
        %v1567 = vsel %vm233, %v1562, %v1566
        %v1569 = vshrl.u32 %v1485, 16
        %v1571 = vrot.slane %v1569, 4
        %v1572 = vshll.u32 %v1485, 16
        %v1574 = vrot.slane %v1572, 5
        %v1575 = vor.u32 %v1571, %v1574
        %v1576 = vrot.slane %v1575, 4
        %v1578 = vshll.u32 %v1495, 16
        %v1580 = vrot.slane %v1578, 5
        %v1581 = vsel %vm233, %v1576, %v1580
        %v1583 = vshrl.u32 %v1486, 16
        %v1585 = vrot.slane %v1583, 4
        %v1586 = vshll.u32 %v1486, 16
        %v1588 = vrot.slane %v1586, 5
        %v1589 = vor.u32 %v1585, %v1588
        %v1590 = vrot.slane %v1589, 4
        %v1592 = vshll.u32 %v1496, 16
        %v1594 = vrot.slane %v1592, 5
        %v1595 = vsel %vm233, %v1590, %v1594
        %v1597 = vshrl.u32 %v1487, 16
        %v1599 = vrot.slane %v1597, 4
        %v1600 = vshll.u32 %v1487, 16
        %v1602 = vrot.slane %v1600, 5
        %v1603 = vor.u32 %v1599, %v1602
        %v1604 = vrot.slane %v1603, 4
        %v1606 = vshll.u32 %v1497, 16
        %v1608 = vrot.slane %v1606, 5
        %v1609 = vsel %vm233, %v1604, %v1608
        %s1610 = scalar_lea.vmem %s1, 36
        %v1611 = vld [vmem:[%s1610] sm:$0xf]
        %v1612 = vunpack.c.l.b16 %v1511
        %v1613 = vunpack.c.l.b16 %v1525
        %v1614 = vunpack.c.l.b16 %v1539
        %v1615 = vunpack.c.l.b16 %v1553
        %v1616 = vunpack.c.l.b16 %v1567
        %v1617 = vunpack.c.l.b16 %v1581
        %v1618 = vunpack.c.l.b16 %v1595
        %v1619 = vunpack.c.l.b16 %v1609
        %v1620 = vpack.c.b16 %v1613, %v1612
        %v1621 = vpack.c.b16 %v1615, %v1614
        %v1622 = vpack.c.b16 %v1617, %v1616
        %v1623 = vpack.c.b16 %v1619, %v1618
        %v1625 = vsel %vm360, %v1620, 0
        %v1628 = vsel %vm360, %v1621, 0
        %v1631 = vsel %vm360, %v1622, 0
        %v1634 = vsel %vm360, %v1623, 0
        %v1637 = vsel %vm373, %v1611, 0
        %1639 = vmatpush.bf16.msra.mxu0 0
        %1640 = vmatpush.bf16.msra.mxu0 0
        %1641 = vmatpush.bf16.msra.mxu0 0
        %1642 = vmatpush.bf16.msra.mxu0 0
        %1643 = vmatpush.bf16.msra.mxu0 0
        %1644 = vmatpush.bf16.msra.mxu0 0
        %1645 = vmatpush.bf16.msra.mxu0 0
        %1646 = vmatpush.bf16.msra.mxu0 %v1637
        %1647 = vmatmul.bf16.gmra.mxu0 %v1625
        %v1648 = vpop.f32.mrf.mxu0
        %v1649 = vadd.f32 0.0, %v1648
        %v1650 = vpop.f32.mrf.mxu0
        %v1651 = vadd.f32 0.0, %v1650
        %1652 = vmatmul.bf16.gmra.mxu0 %v1628
        %v1653 = vpop.f32.mrf.mxu0
        %v1654 = vadd.f32 0.0, %v1653
        %v1655 = vpop.f32.mrf.mxu0
        %v1656 = vadd.f32 0.0, %v1655
        %1657 = vmatmul.bf16.gmra.mxu0 %v1631
        %v1658 = vpop.f32.mrf.mxu0
        %v1659 = vadd.f32 0.0, %v1658
        %v1660 = vpop.f32.mrf.mxu0
        %v1661 = vadd.f32 0.0, %v1660
        %1662 = vmatmul.bf16.gmra.mxu0 %v1634
        %v1663 = vpop.f32.mrf.mxu0
        %v1664 = vadd.f32 0.0, %v1663
        %v1665 = vpop.f32.mrf.mxu0
        %v1666 = vadd.f32 0.0, %v1665
        %1667 = vdwg.mxu0
        %v1676 = vunpack.c.l.b16 %v1480
        %v1677 = vunpack.c.l.b16 %v1481
        %v1678 = vunpack.c.l.b16 %v1482
        %v1679 = vunpack.c.l.b16 %v1483
        %v1680 = vunpack.c.l.b16 %v1484
        %v1681 = vunpack.c.l.b16 %v1485
        %v1682 = vunpack.c.l.b16 %v1486
        %v1683 = vunpack.c.l.b16 %v1487
        %v1684 = vpack.c.b16 %v1677, %v1676
        %v1685 = vpack.c.b16 %v1679, %v1678
        %v1686 = vpack.c.b16 %v1681, %v1680
        %v1687 = vpack.c.b16 %v1683, %v1682
        %v1689 = vsel %vm360, %v1684, 0
        %v1692 = vsel %vm360, %v1685, 0
        %v1695 = vsel %vm360, %v1686, 0
        %v1698 = vsel %vm360, %v1687, 0
        %v1701 = vsel %vm373, %v1489, 0
        %1703 = vmatpush.bf16.msra.mxu0 0
        %1704 = vmatpush.bf16.msra.mxu0 0
        %1705 = vmatpush.bf16.msra.mxu0 0
        %1706 = vmatpush.bf16.msra.mxu0 0
        %1707 = vmatpush.bf16.msra.mxu0 0
        %1708 = vmatpush.bf16.msra.mxu0 0
        %1709 = vmatpush.bf16.msra.mxu0 0
        %1710 = vmatpush.bf16.msra.mxu0 %v1701
        %1711 = vmatmul.bf16.gmra.mxu0 %v1689
        %v1712 = vpop.f32.mrf.mxu0
        %v1713 = vadd.f32 %v1649, %v1712
        %v1714 = vpop.f32.mrf.mxu0
        %v1715 = vadd.f32 %v1651, %v1714
        %1716 = vmatmul.bf16.gmra.mxu0 %v1692
        %v1717 = vpop.f32.mrf.mxu0
        %v1718 = vadd.f32 %v1654, %v1717
        %v1719 = vpop.f32.mrf.mxu0
        %v1720 = vadd.f32 %v1656, %v1719
        %1721 = vmatmul.bf16.gmra.mxu0 %v1695
        %v1722 = vpop.f32.mrf.mxu0
        %v1723 = vadd.f32 %v1659, %v1722
        %v1724 = vpop.f32.mrf.mxu0
        %v1725 = vadd.f32 %v1661, %v1724
        %1726 = vmatmul.bf16.gmra.mxu0 %v1698
        %v1727 = vpop.f32.mrf.mxu0
        %v1728 = vadd.f32 %v1664, %v1727
        %v1729 = vpop.f32.mrf.mxu0
        %v1730 = vadd.f32 %v1666, %v1729
        %1731 = vdwg.mxu0
        %s1732 = scalar_lea.vmem %s204, 16
        %v1733 = vld [vmem:[%s1732] sm:$0xf]
        %v1734 = vld [vmem:[%s1732 + $0x8] sm:$0xf]
        %v1735 = vld [vmem:[%s1732 + $0x10] sm:$0xf]
        %v1736 = vld [vmem:[%s1732 + $0x18] sm:$0xf]
        %v1737 = vld [vmem:[%s1732 + $0x20] sm:$0xf]
        %v1738 = vld [vmem:[%s1732 + $0x28] sm:$0xf]
        %v1739 = vld [vmem:[%s1732 + $0x30] sm:$0xf]
        %v1740 = vld [vmem:[%s1732 + $0x38] sm:$0xf]
        %s1741 = scalar_lea.vmem %s1, 40
        %v1742 = vld [vmem:[%s1741] sm:$0xf]
        %v1751 = vunpack.c.l.b16 %v1733
        %v1752 = vunpack.c.l.b16 %v1734
        %v1753 = vunpack.c.l.b16 %v1735
        %v1754 = vunpack.c.l.b16 %v1736
        %v1755 = vunpack.c.l.b16 %v1737
        %v1756 = vunpack.c.l.b16 %v1738
        %v1757 = vunpack.c.l.b16 %v1739
        %v1758 = vunpack.c.l.b16 %v1740
        %v1759 = vpack.c.b16 %v1752, %v1751
        %v1760 = vpack.c.b16 %v1754, %v1753
        %v1761 = vpack.c.b16 %v1756, %v1755
        %v1762 = vpack.c.b16 %v1758, %v1757
        %v1764 = vsel %vm360, %v1759, 0
        %v1767 = vsel %vm360, %v1760, 0
        %v1770 = vsel %vm360, %v1761, 0
        %v1773 = vsel %vm360, %v1762, 0
        %v1776 = vsel %vm373, %v1742, 0
        %1778 = vmatpush.bf16.msra.mxu0 0
        %1779 = vmatpush.bf16.msra.mxu0 0
        %1780 = vmatpush.bf16.msra.mxu0 0
        %1781 = vmatpush.bf16.msra.mxu0 0
        %1782 = vmatpush.bf16.msra.mxu0 0
        %1783 = vmatpush.bf16.msra.mxu0 0
        %1784 = vmatpush.bf16.msra.mxu0 0
        %1785 = vmatpush.bf16.msra.mxu0 %v1776
        %1786 = vmatmul.bf16.gmra.mxu0 %v1764
        %v1787 = vpop.f32.mrf.mxu0
        %v1788 = vadd.f32 0.0, %v1787
        %v1789 = vpop.f32.mrf.mxu0
        %v1790 = vadd.f32 0.0, %v1789
        %1791 = vmatmul.bf16.gmra.mxu0 %v1767
        %v1792 = vpop.f32.mrf.mxu0
        %v1793 = vadd.f32 0.0, %v1792
        %v1794 = vpop.f32.mrf.mxu0
        %v1795 = vadd.f32 0.0, %v1794
        %1796 = vmatmul.bf16.gmra.mxu0 %v1770
        %v1797 = vpop.f32.mrf.mxu0
        %v1798 = vadd.f32 0.0, %v1797
        %v1799 = vpop.f32.mrf.mxu0
        %v1800 = vadd.f32 0.0, %v1799
        %1801 = vmatmul.bf16.gmra.mxu0 %v1773
        %v1802 = vpop.f32.mrf.mxu0
        %v1803 = vadd.f32 0.0, %v1802
        %v1804 = vpop.f32.mrf.mxu0
        %v1805 = vadd.f32 0.0, %v1804
        %1806 = vdwg.mxu0
        %v1807 = vadd.f32 %v1713, %v1788
        %v1808 = vadd.f32 %v1715, %v1790
        %v1809 = vadd.f32 %v1718, %v1793
        %v1810 = vadd.f32 %v1720, %v1795
        %v1811 = vadd.f32 %v1723, %v1798
        %v1812 = vadd.f32 %v1725, %v1800
        %v1813 = vadd.f32 %v1728, %v1803
        %v1814 = vadd.f32 %v1730, %v1805
        %v1815 = vld [vmem:[%s1732] sm:$0xf]
        %v1816 = vld [vmem:[%s1732 + $0x4] sm:$0x1]
        %v1817 = vld [vmem:[%s1732 + $0x8] sm:$0xf]
        %v1818 = vld [vmem:[%s1732 + $0xc] sm:$0x1]
        %v1819 = vld [vmem:[%s1732 + $0x10] sm:$0xf]
        %v1820 = vld [vmem:[%s1732 + $0x14] sm:$0x1]
        %v1821 = vld [vmem:[%s1732 + $0x18] sm:$0xf]
        %v1822 = vld [vmem:[%s1732 + $0x1c] sm:$0x1]
        %v1823 = vld [vmem:[%s1732 + $0x20] sm:$0xf]
        %v1824 = vld [vmem:[%s1732 + $0x24] sm:$0x1]
        %v1825 = vld [vmem:[%s1732 + $0x28] sm:$0xf]
        %v1826 = vld [vmem:[%s1732 + $0x2c] sm:$0x1]
        %v1827 = vld [vmem:[%s1732 + $0x30] sm:$0xf]
        %v1828 = vld [vmem:[%s1732 + $0x34] sm:$0x1]
        %v1829 = vld [vmem:[%s1732 + $0x38] sm:$0xf]
        %v1830 = vld [vmem:[%s1732 + $0x3c] sm:$0x1]
        %v1832 = vshrl.u32 %v1815, 16
        %v1834 = vrot.slane %v1832, 4
        %v1835 = vshll.u32 %v1815, 16
        %v1837 = vrot.slane %v1835, 5
        %v1838 = vor.u32 %v1834, %v1837
        %v1839 = vrot.slane %v1838, 4
        %v1841 = vshll.u32 %v1816, 16
        %v1843 = vrot.slane %v1841, 5
        %v1844 = vsel %vm233, %v1839, %v1843
        %v1846 = vshrl.u32 %v1817, 16
        %v1848 = vrot.slane %v1846, 4
        %v1849 = vshll.u32 %v1817, 16
        %v1851 = vrot.slane %v1849, 5
        %v1852 = vor.u32 %v1848, %v1851
        %v1853 = vrot.slane %v1852, 4
        %v1855 = vshll.u32 %v1818, 16
        %v1857 = vrot.slane %v1855, 5
        %v1858 = vsel %vm233, %v1853, %v1857
        %v1860 = vshrl.u32 %v1819, 16
        %v1862 = vrot.slane %v1860, 4
        %v1863 = vshll.u32 %v1819, 16
        %v1865 = vrot.slane %v1863, 5
        %v1866 = vor.u32 %v1862, %v1865
        %v1867 = vrot.slane %v1866, 4
        %v1869 = vshll.u32 %v1820, 16
        %v1871 = vrot.slane %v1869, 5
        %v1872 = vsel %vm233, %v1867, %v1871
        %v1874 = vshrl.u32 %v1821, 16
        %v1876 = vrot.slane %v1874, 4
        %v1877 = vshll.u32 %v1821, 16
        %v1879 = vrot.slane %v1877, 5
        %v1880 = vor.u32 %v1876, %v1879
        %v1881 = vrot.slane %v1880, 4
        %v1883 = vshll.u32 %v1822, 16
        %v1885 = vrot.slane %v1883, 5
        %v1886 = vsel %vm233, %v1881, %v1885
        %v1888 = vshrl.u32 %v1823, 16
        %v1890 = vrot.slane %v1888, 4
        %v1891 = vshll.u32 %v1823, 16
        %v1893 = vrot.slane %v1891, 5
        %v1894 = vor.u32 %v1890, %v1893
        %v1895 = vrot.slane %v1894, 4
        %v1897 = vshll.u32 %v1824, 16
        %v1899 = vrot.slane %v1897, 5
        %v1900 = vsel %vm233, %v1895, %v1899
        %v1902 = vshrl.u32 %v1825, 16
        %v1904 = vrot.slane %v1902, 4
        %v1905 = vshll.u32 %v1825, 16
        %v1907 = vrot.slane %v1905, 5
        %v1908 = vor.u32 %v1904, %v1907
        %v1909 = vrot.slane %v1908, 4
        %v1911 = vshll.u32 %v1826, 16
        %v1913 = vrot.slane %v1911, 5
        %v1914 = vsel %vm233, %v1909, %v1913
        %v1916 = vshrl.u32 %v1827, 16
        %v1918 = vrot.slane %v1916, 4
        %v1919 = vshll.u32 %v1827, 16
        %v1921 = vrot.slane %v1919, 5
        %v1922 = vor.u32 %v1918, %v1921
        %v1923 = vrot.slane %v1922, 4
        %v1925 = vshll.u32 %v1828, 16
        %v1927 = vrot.slane %v1925, 5
        %v1928 = vsel %vm233, %v1923, %v1927
        %v1930 = vshrl.u32 %v1829, 16
        %v1932 = vrot.slane %v1930, 4
        %v1933 = vshll.u32 %v1829, 16
        %v1935 = vrot.slane %v1933, 5
        %v1936 = vor.u32 %v1932, %v1935
        %v1937 = vrot.slane %v1936, 4
        %v1939 = vshll.u32 %v1830, 16
        %v1941 = vrot.slane %v1939, 5
        %v1942 = vsel %vm233, %v1937, %v1941
        %s1943 = scalar_lea.vmem %s1, 44
        %v1944 = vld [vmem:[%s1943] sm:$0xf]
        %v1945 = vunpack.c.l.b16 %v1844
        %v1946 = vunpack.c.l.b16 %v1858
        %v1947 = vunpack.c.l.b16 %v1872
        %v1948 = vunpack.c.l.b16 %v1886
        %v1949 = vunpack.c.l.b16 %v1900
        %v1950 = vunpack.c.l.b16 %v1914
        %v1951 = vunpack.c.l.b16 %v1928
        %v1952 = vunpack.c.l.b16 %v1942
        %v1953 = vpack.c.b16 %v1946, %v1945
        %v1954 = vpack.c.b16 %v1948, %v1947
        %v1955 = vpack.c.b16 %v1950, %v1949
        %v1956 = vpack.c.b16 %v1952, %v1951
        %v1958 = vsel %vm360, %v1953, 0
        %v1961 = vsel %vm360, %v1954, 0
        %v1964 = vsel %vm360, %v1955, 0
        %v1967 = vsel %vm360, %v1956, 0
        %v1970 = vsel %vm373, %v1944, 0
        %1972 = vmatpush.bf16.msra.mxu0 0
        %1973 = vmatpush.bf16.msra.mxu0 0
        %1974 = vmatpush.bf16.msra.mxu0 0
        %1975 = vmatpush.bf16.msra.mxu0 0
        %1976 = vmatpush.bf16.msra.mxu0 0
        %1977 = vmatpush.bf16.msra.mxu0 0
        %1978 = vmatpush.bf16.msra.mxu0 0
        %1979 = vmatpush.bf16.msra.mxu0 %v1970
        %1980 = vmatmul.bf16.gmra.mxu0 %v1958
        %v1981 = vpop.f32.mrf.mxu0
        %v1982 = vadd.f32 0.0, %v1981
        %v1983 = vpop.f32.mrf.mxu0
        %v1984 = vadd.f32 0.0, %v1983
        %1985 = vmatmul.bf16.gmra.mxu0 %v1961
        %v1986 = vpop.f32.mrf.mxu0
        %v1987 = vadd.f32 0.0, %v1986
        %v1988 = vpop.f32.mrf.mxu0
        %v1989 = vadd.f32 0.0, %v1988
        %1990 = vmatmul.bf16.gmra.mxu0 %v1964
        %v1991 = vpop.f32.mrf.mxu0
        %v1992 = vadd.f32 0.0, %v1991
        %v1993 = vpop.f32.mrf.mxu0
        %v1994 = vadd.f32 0.0, %v1993
        %1995 = vmatmul.bf16.gmra.mxu0 %v1967
        %v1996 = vpop.f32.mrf.mxu0
        %v1997 = vadd.f32 0.0, %v1996
        %v1998 = vpop.f32.mrf.mxu0
        %v1999 = vadd.f32 0.0, %v1998
        %2000 = vdwg.mxu0
        %v2001 = vadd.f32 %v1807, %v1982
        %v2002 = vadd.f32 %v1808, %v1984
        %v2003 = vadd.f32 %v1809, %v1987
        %v2004 = vadd.f32 %v1810, %v1989
        %v2005 = vadd.f32 %v1811, %v1992
        %v2006 = vadd.f32 %v1812, %v1994
        %v2007 = vadd.f32 %v1813, %v1997
        %v2008 = vadd.f32 %v1814, %v1999
        %v2009 = vpack.c.bf16 %v2001, %v2001
        %v2010 = vpack.c.bf16 %v2002, %v2002
        %v2011 = vpack.c.bf16 %v2003, %v2003
        %v2012 = vpack.c.bf16 %v2004, %v2004
        %v2013 = vpack.c.bf16 %v2005, %v2005
        %v2014 = vpack.c.bf16 %v2006, %v2006
        %v2015 = vpack.c.bf16 %v2007, %v2007
        %v2016 = vpack.c.bf16 %v2008, %v2008
        %s2017 = scalar_lea.vmem %s187, 64 [#allocation2]
        %2018 = vst.msk [vmem:[%s2017] sm:$0xf] %vm755, %v2009
        %2019 = vst.msk [vmem:[%s2017 + $0x4] sm:$0xf] %vm755, %v2010
        %2020 = vst.msk [vmem:[%s2017 + $0x8] sm:$0xf] %vm755, %v2011
        %2021 = vst.msk [vmem:[%s2017 + $0xc] sm:$0xf] %vm755, %v2012
        %2022 = vst.msk [vmem:[%s2017 + $0x10] sm:$0xf] %vm755, %v2013
        %2023 = vst.msk [vmem:[%s2017 + $0x14] sm:$0xf] %vm755, %v2014
        %2024 = vst.msk [vmem:[%s2017 + $0x18] sm:$0xf] %vm755, %v2015
        %2025 = vst.msk [vmem:[%s2017 + $0x1c] sm:$0xf] %vm755, %v2016
        %v2026 = vsel %vm360, %v2001, 0.0
        %v2027 = vsel %vm360, %v2002, 0.0
        %v2028 = vadd.f32 %v2026, %v2027
        %v2029 = vsel %vm360, %v2003, 0.0
        %v2030 = vadd.f32 %v2028, %v2029
        %v2031 = vsel %vm360, %v2004, 0.0
        %v2032 = vadd.f32 %v2030, %v2031
        %v2033 = vsel %vm360, %v2005, 0.0
        %v2034 = vadd.f32 %v2032, %v2033
        %v2035 = vsel %vm360, %v2006, 0.0
        %v2036 = vadd.f32 %v2034, %v2035
        %v2037 = vsel %vm360, %v2007, 0.0
        %v2038 = vadd.f32 %v2036, %v2037
        %v2039 = vsel %vm360, %v2008, 0.0
        %v2040 = vadd.f32 %v2038, %v2039
        %v2041 = vadd.f32 %v1455, %v2040
        %v2042 = vmul.f32 %v2001, %v2001
        %v2043 = vmul.f32 %v2002, %v2002
        %v2044 = vmul.f32 %v2003, %v2003
        %v2045 = vmul.f32 %v2004, %v2004
        %v2046 = vmul.f32 %v2005, %v2005
        %v2047 = vmul.f32 %v2006, %v2006
        %v2048 = vmul.f32 %v2007, %v2007
        %v2049 = vmul.f32 %v2008, %v2008
        %v2050 = vsel %vm360, %v2042, 0.0
        %v2051 = vsel %vm360, %v2043, 0.0
        %v2052 = vadd.f32 %v2050, %v2051
        %v2053 = vsel %vm360, %v2044, 0.0
        %v2054 = vadd.f32 %v2052, %v2053
        %v2055 = vsel %vm360, %v2045, 0.0
        %v2056 = vadd.f32 %v2054, %v2055
        %v2057 = vsel %vm360, %v2046, 0.0
        %v2058 = vadd.f32 %v2056, %v2057
        %v2059 = vsel %vm360, %v2047, 0.0
        %v2060 = vadd.f32 %v2058, %v2059
        %v2061 = vsel %vm360, %v2048, 0.0
        %v2062 = vadd.f32 %v2060, %v2061
        %v2063 = vsel %vm360, %v2049, 0.0
        %v2064 = vadd.f32 %v2062, %v2063
        %v2065 = vadd.f32 %v1479, %v2064
        %v2066 = vld [vmem:[%s470] sm:$0xf]
        %v2067 = vld [vmem:[%s470 + $0x4] sm:$0x1]
        %v2068 = vld [vmem:[%s470 + $0x8] sm:$0xf]
        %v2069 = vld [vmem:[%s470 + $0xc] sm:$0x1]
        %v2070 = vld [vmem:[%s470 + $0x10] sm:$0xf]
        %v2071 = vld [vmem:[%s470 + $0x14] sm:$0x1]
        %v2072 = vld [vmem:[%s470 + $0x18] sm:$0xf]
        %v2073 = vld [vmem:[%s470 + $0x1c] sm:$0x1]
        %v2074 = vld [vmem:[%s470 + $0x20] sm:$0xf]
        %v2075 = vld [vmem:[%s470 + $0x24] sm:$0x1]
        %v2076 = vld [vmem:[%s470 + $0x28] sm:$0xf]
        %v2077 = vld [vmem:[%s470 + $0x2c] sm:$0x1]
        %v2078 = vld [vmem:[%s470 + $0x30] sm:$0xf]
        %v2079 = vld [vmem:[%s470 + $0x34] sm:$0x1]
        %v2080 = vld [vmem:[%s470 + $0x38] sm:$0xf]
        %v2081 = vld [vmem:[%s470 + $0x3c] sm:$0x1]
        %v2083 = vshrl.u32 %v2066, 16
        %v2085 = vrot.slane %v2083, 4
        %v2086 = vshll.u32 %v2066, 16
        %v2088 = vrot.slane %v2086, 5
        %v2089 = vor.u32 %v2085, %v2088
        %v2090 = vrot.slane %v2089, 4
        %v2092 = vshll.u32 %v2067, 16
        %v2094 = vrot.slane %v2092, 5
        %v2095 = vsel %vm233, %v2090, %v2094
        %v2097 = vshrl.u32 %v2068, 16
        %v2099 = vrot.slane %v2097, 4
        %v2100 = vshll.u32 %v2068, 16
        %v2102 = vrot.slane %v2100, 5
        %v2103 = vor.u32 %v2099, %v2102
        %v2104 = vrot.slane %v2103, 4
        %v2106 = vshll.u32 %v2069, 16
        %v2108 = vrot.slane %v2106, 5
        %v2109 = vsel %vm233, %v2104, %v2108
        %v2111 = vshrl.u32 %v2070, 16
        %v2113 = vrot.slane %v2111, 4
        %v2114 = vshll.u32 %v2070, 16
        %v2116 = vrot.slane %v2114, 5
        %v2117 = vor.u32 %v2113, %v2116
        %v2118 = vrot.slane %v2117, 4
        %v2120 = vshll.u32 %v2071, 16
        %v2122 = vrot.slane %v2120, 5
        %v2123 = vsel %vm233, %v2118, %v2122
        %v2125 = vshrl.u32 %v2072, 16
        %v2127 = vrot.slane %v2125, 4
        %v2128 = vshll.u32 %v2072, 16
        %v2130 = vrot.slane %v2128, 5
        %v2131 = vor.u32 %v2127, %v2130
        %v2132 = vrot.slane %v2131, 4
        %v2134 = vshll.u32 %v2073, 16
        %v2136 = vrot.slane %v2134, 5
        %v2137 = vsel %vm233, %v2132, %v2136
        %v2139 = vshrl.u32 %v2074, 16
        %v2141 = vrot.slane %v2139, 4
        %v2142 = vshll.u32 %v2074, 16
        %v2144 = vrot.slane %v2142, 5
        %v2145 = vor.u32 %v2141, %v2144
        %v2146 = vrot.slane %v2145, 4
        %v2148 = vshll.u32 %v2075, 16
        %v2150 = vrot.slane %v2148, 5
        %v2151 = vsel %vm233, %v2146, %v2150
        %v2153 = vshrl.u32 %v2076, 16
        %v2155 = vrot.slane %v2153, 4
        %v2156 = vshll.u32 %v2076, 16
        %v2158 = vrot.slane %v2156, 5
        %v2159 = vor.u32 %v2155, %v2158
        %v2160 = vrot.slane %v2159, 4
        %v2162 = vshll.u32 %v2077, 16
        %v2164 = vrot.slane %v2162, 5
        %v2165 = vsel %vm233, %v2160, %v2164
        %v2167 = vshrl.u32 %v2078, 16
        %v2169 = vrot.slane %v2167, 4
        %v2170 = vshll.u32 %v2078, 16
        %v2172 = vrot.slane %v2170, 5
        %v2173 = vor.u32 %v2169, %v2172
        %v2174 = vrot.slane %v2173, 4
        %v2176 = vshll.u32 %v2079, 16
        %v2178 = vrot.slane %v2176, 5
        %v2179 = vsel %vm233, %v2174, %v2178
        %v2181 = vshrl.u32 %v2080, 16
        %v2183 = vrot.slane %v2181, 4
        %v2184 = vshll.u32 %v2080, 16
        %v2186 = vrot.slane %v2184, 5
        %v2187 = vor.u32 %v2183, %v2186
        %v2188 = vrot.slane %v2187, 4
        %v2190 = vshll.u32 %v2081, 16
        %v2192 = vrot.slane %v2190, 5
        %v2193 = vsel %vm233, %v2188, %v2192
        %s2194 = scalar_lea.vmem %s1, 48
        %v2195 = vld [vmem:[%s2194] sm:$0xf]
        %v2196 = vld [vmem:[%s470] sm:$0xe]
        %v2197 = vld [vmem:[%s470 + $0x8] sm:$0xe]
        %v2198 = vld [vmem:[%s470 + $0x10] sm:$0xe]
        %v2199 = vld [vmem:[%s470 + $0x18] sm:$0xe]
        %v2200 = vld [vmem:[%s470 + $0x20] sm:$0xe]
        %v2201 = vld [vmem:[%s470 + $0x28] sm:$0xe]
        %v2202 = vld [vmem:[%s470 + $0x30] sm:$0xe]
        %v2203 = vld [vmem:[%s470 + $0x38] sm:$0xe]
        %v2220 = vrot.slane %v2196, 5
        %v2221 = vrot.slane %v2220, 4
        %v2222 = vrot.slane %v2067, 5
        %v2223 = vsel %vm960, %v2221, %v2222
        %v2224 = vrot.slane %v2197, 5
        %v2225 = vrot.slane %v2224, 4
        %v2226 = vrot.slane %v2069, 5
        %v2227 = vsel %vm960, %v2225, %v2226
        %v2228 = vrot.slane %v2198, 5
        %v2229 = vrot.slane %v2228, 4
        %v2230 = vrot.slane %v2071, 5
        %v2231 = vsel %vm960, %v2229, %v2230
        %v2232 = vrot.slane %v2199, 5
        %v2233 = vrot.slane %v2232, 4
        %v2234 = vrot.slane %v2073, 5
        %v2235 = vsel %vm960, %v2233, %v2234
        %v2236 = vrot.slane %v2200, 5
        %v2237 = vrot.slane %v2236, 4
        %v2238 = vrot.slane %v2075, 5
        %v2239 = vsel %vm960, %v2237, %v2238
        %v2240 = vrot.slane %v2201, 5
        %v2241 = vrot.slane %v2240, 4
        %v2242 = vrot.slane %v2077, 5
        %v2243 = vsel %vm960, %v2241, %v2242
        %v2244 = vrot.slane %v2202, 5
        %v2245 = vrot.slane %v2244, 4
        %v2246 = vrot.slane %v2079, 5
        %v2247 = vsel %vm960, %v2245, %v2246
        %v2248 = vrot.slane %v2203, 5
        %v2249 = vrot.slane %v2248, 4
        %v2250 = vrot.slane %v2081, 5
        %v2251 = vsel %vm960, %v2249, %v2250
        %s2252 = scalar_lea.vmem %s1, 52
        %v2253 = vld [vmem:[%s2252] sm:$0xf]
        %v2254 = vunpack.c.l.b16 %v2223
        %v2255 = vunpack.c.l.b16 %v2227
        %v2256 = vunpack.c.l.b16 %v2231
        %v2257 = vunpack.c.l.b16 %v2235
        %v2258 = vunpack.c.l.b16 %v2239
        %v2259 = vunpack.c.l.b16 %v2243
        %v2260 = vunpack.c.l.b16 %v2247
        %v2261 = vunpack.c.l.b16 %v2251
        %v2262 = vpack.c.b16 %v2255, %v2254
        %v2263 = vpack.c.b16 %v2257, %v2256
        %v2264 = vpack.c.b16 %v2259, %v2258
        %v2265 = vpack.c.b16 %v2261, %v2260
        %v2267 = vsel %vm360, %v2262, 0
        %v2270 = vsel %vm360, %v2263, 0
        %v2273 = vsel %vm360, %v2264, 0
        %v2276 = vsel %vm360, %v2265, 0
        %v2279 = vsel %vm373, %v2253, 0
        %2281 = vmatpush.bf16.msra.mxu0 0
        %2282 = vmatpush.bf16.msra.mxu0 0
        %2283 = vmatpush.bf16.msra.mxu0 0
        %2284 = vmatpush.bf16.msra.mxu0 0
        %2285 = vmatpush.bf16.msra.mxu0 0
        %2286 = vmatpush.bf16.msra.mxu0 0
        %2287 = vmatpush.bf16.msra.mxu0 0
        %2288 = vmatpush.bf16.msra.mxu0 %v2279
        %2289 = vmatmul.bf16.gmra.mxu0 %v2267
        %v2290 = vpop.f32.mrf.mxu0
        %v2291 = vadd.f32 0.0, %v2290
        %v2292 = vpop.f32.mrf.mxu0
        %v2293 = vadd.f32 0.0, %v2292
        %2294 = vmatmul.bf16.gmra.mxu0 %v2270
        %v2295 = vpop.f32.mrf.mxu0
        %v2296 = vadd.f32 0.0, %v2295
        %v2297 = vpop.f32.mrf.mxu0
        %v2298 = vadd.f32 0.0, %v2297
        %2299 = vmatmul.bf16.gmra.mxu0 %v2273
        %v2300 = vpop.f32.mrf.mxu0
        %v2301 = vadd.f32 0.0, %v2300
        %v2302 = vpop.f32.mrf.mxu0
        %v2303 = vadd.f32 0.0, %v2302
        %2304 = vmatmul.bf16.gmra.mxu0 %v2276
        %v2305 = vpop.f32.mrf.mxu0
        %v2306 = vadd.f32 0.0, %v2305
        %v2307 = vpop.f32.mrf.mxu0
        %v2308 = vadd.f32 0.0, %v2307
        %2309 = vdwg.mxu0
        %v2310 = vunpack.c.l.b16 %v2095
        %v2311 = vunpack.c.l.b16 %v2109
        %v2312 = vunpack.c.l.b16 %v2123
        %v2313 = vunpack.c.l.b16 %v2137
        %v2314 = vunpack.c.l.b16 %v2151
        %v2315 = vunpack.c.l.b16 %v2165
        %v2316 = vunpack.c.l.b16 %v2179
        %v2317 = vunpack.c.l.b16 %v2193
        %v2318 = vpack.c.b16 %v2311, %v2310
        %v2319 = vpack.c.b16 %v2313, %v2312
        %v2320 = vpack.c.b16 %v2315, %v2314
        %v2321 = vpack.c.b16 %v2317, %v2316
        %v2323 = vsel %vm360, %v2318, 0
        %v2326 = vsel %vm360, %v2319, 0
        %v2329 = vsel %vm360, %v2320, 0
        %v2332 = vsel %vm360, %v2321, 0
        %v2335 = vsel %vm373, %v2195, 0
        %2337 = vmatpush.bf16.msra.mxu0 0
        %2338 = vmatpush.bf16.msra.mxu0 0
        %2339 = vmatpush.bf16.msra.mxu0 0
        %2340 = vmatpush.bf16.msra.mxu0 0
        %2341 = vmatpush.bf16.msra.mxu0 0
        %2342 = vmatpush.bf16.msra.mxu0 0
        %2343 = vmatpush.bf16.msra.mxu0 0
        %2344 = vmatpush.bf16.msra.mxu0 %v2335
        %2345 = vmatmul.bf16.gmra.mxu0 %v2323
        %v2346 = vpop.f32.mrf.mxu0
        %v2347 = vadd.f32 %v2291, %v2346
        %v2348 = vpop.f32.mrf.mxu0
        %v2349 = vadd.f32 %v2293, %v2348
        %2350 = vmatmul.bf16.gmra.mxu0 %v2326
        %v2351 = vpop.f32.mrf.mxu0
        %v2352 = vadd.f32 %v2296, %v2351
        %v2353 = vpop.f32.mrf.mxu0
        %v2354 = vadd.f32 %v2298, %v2353
        %2355 = vmatmul.bf16.gmra.mxu0 %v2329
        %v2356 = vpop.f32.mrf.mxu0
        %v2357 = vadd.f32 %v2301, %v2356
        %v2358 = vpop.f32.mrf.mxu0
        %v2359 = vadd.f32 %v2303, %v2358
        %2360 = vmatmul.bf16.gmra.mxu0 %v2332
        %v2361 = vpop.f32.mrf.mxu0
        %v2362 = vadd.f32 %v2306, %v2361
        %v2363 = vpop.f32.mrf.mxu0
        %v2364 = vadd.f32 %v2308, %v2363
        %2365 = vdwg.mxu0
        %v2366 = vld [vmem:[%s1732] sm:$0xf]
        %v2367 = vld [vmem:[%s1732 + $0x4] sm:$0x1]
        %v2368 = vld [vmem:[%s1732 + $0x8] sm:$0xf]
        %v2369 = vld [vmem:[%s1732 + $0xc] sm:$0x1]
        %v2370 = vld [vmem:[%s1732 + $0x10] sm:$0xf]
        %v2371 = vld [vmem:[%s1732 + $0x14] sm:$0x1]
        %v2372 = vld [vmem:[%s1732 + $0x18] sm:$0xf]
        %v2373 = vld [vmem:[%s1732 + $0x1c] sm:$0x1]
        %v2374 = vld [vmem:[%s1732 + $0x20] sm:$0xf]
        %v2375 = vld [vmem:[%s1732 + $0x24] sm:$0x1]
        %v2376 = vld [vmem:[%s1732 + $0x28] sm:$0xf]
        %v2377 = vld [vmem:[%s1732 + $0x2c] sm:$0x1]
        %v2378 = vld [vmem:[%s1732 + $0x30] sm:$0xf]
        %v2379 = vld [vmem:[%s1732 + $0x34] sm:$0x1]
        %v2380 = vld [vmem:[%s1732 + $0x38] sm:$0xf]
        %v2381 = vld [vmem:[%s1732 + $0x3c] sm:$0x1]
        %v2383 = vshrl.u32 %v2366, 16
        %v2385 = vrot.slane %v2383, 4
        %v2386 = vshll.u32 %v2366, 16
        %v2388 = vrot.slane %v2386, 5
        %v2389 = vor.u32 %v2385, %v2388
        %v2390 = vrot.slane %v2389, 4
        %v2392 = vshll.u32 %v2367, 16
        %v2394 = vrot.slane %v2392, 5
        %v2395 = vsel %vm233, %v2390, %v2394
        %v2397 = vshrl.u32 %v2368, 16
        %v2399 = vrot.slane %v2397, 4
        %v2400 = vshll.u32 %v2368, 16
        %v2402 = vrot.slane %v2400, 5
        %v2403 = vor.u32 %v2399, %v2402
        %v2404 = vrot.slane %v2403, 4
        %v2406 = vshll.u32 %v2369, 16
        %v2408 = vrot.slane %v2406, 5
        %v2409 = vsel %vm233, %v2404, %v2408
        %v2411 = vshrl.u32 %v2370, 16
        %v2413 = vrot.slane %v2411, 4
        %v2414 = vshll.u32 %v2370, 16
        %v2416 = vrot.slane %v2414, 5
        %v2417 = vor.u32 %v2413, %v2416
        %v2418 = vrot.slane %v2417, 4
        %v2420 = vshll.u32 %v2371, 16
        %v2422 = vrot.slane %v2420, 5
        %v2423 = vsel %vm233, %v2418, %v2422
        %v2425 = vshrl.u32 %v2372, 16
        %v2427 = vrot.slane %v2425, 4
        %v2428 = vshll.u32 %v2372, 16
        %v2430 = vrot.slane %v2428, 5
        %v2431 = vor.u32 %v2427, %v2430
        %v2432 = vrot.slane %v2431, 4
        %v2434 = vshll.u32 %v2373, 16
        %v2436 = vrot.slane %v2434, 5
        %v2437 = vsel %vm233, %v2432, %v2436
        %v2439 = vshrl.u32 %v2374, 16
        %v2441 = vrot.slane %v2439, 4
        %v2442 = vshll.u32 %v2374, 16
        %v2444 = vrot.slane %v2442, 5
        %v2445 = vor.u32 %v2441, %v2444
        %v2446 = vrot.slane %v2445, 4
        %v2448 = vshll.u32 %v2375, 16
        %v2450 = vrot.slane %v2448, 5
        %v2451 = vsel %vm233, %v2446, %v2450
        %v2453 = vshrl.u32 %v2376, 16
        %v2455 = vrot.slane %v2453, 4
        %v2456 = vshll.u32 %v2376, 16
        %v2458 = vrot.slane %v2456, 5
        %v2459 = vor.u32 %v2455, %v2458
        %v2460 = vrot.slane %v2459, 4
        %v2462 = vshll.u32 %v2377, 16
        %v2464 = vrot.slane %v2462, 5
        %v2465 = vsel %vm233, %v2460, %v2464
        %v2467 = vshrl.u32 %v2378, 16
        %v2469 = vrot.slane %v2467, 4
        %v2470 = vshll.u32 %v2378, 16
        %v2472 = vrot.slane %v2470, 5
        %v2473 = vor.u32 %v2469, %v2472
        %v2474 = vrot.slane %v2473, 4
        %v2476 = vshll.u32 %v2379, 16
        %v2478 = vrot.slane %v2476, 5
        %v2479 = vsel %vm233, %v2474, %v2478
        %v2481 = vshrl.u32 %v2380, 16
        %v2483 = vrot.slane %v2481, 4
        %v2484 = vshll.u32 %v2380, 16
        %v2486 = vrot.slane %v2484, 5
        %v2487 = vor.u32 %v2483, %v2486
        %v2488 = vrot.slane %v2487, 4
        %v2490 = vshll.u32 %v2381, 16
        %v2492 = vrot.slane %v2490, 5
        %v2493 = vsel %vm233, %v2488, %v2492
        %s2494 = scalar_lea.vmem %s1, 56
        %v2495 = vld [vmem:[%s2494] sm:$0xf]
        %v2496 = vunpack.c.l.b16 %v2395
        %v2497 = vunpack.c.l.b16 %v2409
        %v2498 = vunpack.c.l.b16 %v2423
        %v2499 = vunpack.c.l.b16 %v2437
        %v2500 = vunpack.c.l.b16 %v2451
        %v2501 = vunpack.c.l.b16 %v2465
        %v2502 = vunpack.c.l.b16 %v2479
        %v2503 = vunpack.c.l.b16 %v2493
        %v2504 = vpack.c.b16 %v2497, %v2496
        %v2505 = vpack.c.b16 %v2499, %v2498
        %v2506 = vpack.c.b16 %v2501, %v2500
        %v2507 = vpack.c.b16 %v2503, %v2502
        %v2509 = vsel %vm360, %v2504, 0
        %v2512 = vsel %vm360, %v2505, 0
        %v2515 = vsel %vm360, %v2506, 0
        %v2518 = vsel %vm360, %v2507, 0
        %v2521 = vsel %vm373, %v2495, 0
        %2523 = vmatpush.bf16.msra.mxu0 0
        %2524 = vmatpush.bf16.msra.mxu0 0
        %2525 = vmatpush.bf16.msra.mxu0 0
        %2526 = vmatpush.bf16.msra.mxu0 0
        %2527 = vmatpush.bf16.msra.mxu0 0
        %2528 = vmatpush.bf16.msra.mxu0 0
        %2529 = vmatpush.bf16.msra.mxu0 0
        %2530 = vmatpush.bf16.msra.mxu0 %v2521
        %2531 = vmatmul.bf16.gmra.mxu0 %v2509
        %v2532 = vpop.f32.mrf.mxu0
        %v2533 = vadd.f32 0.0, %v2532
        %v2534 = vpop.f32.mrf.mxu0
        %v2535 = vadd.f32 0.0, %v2534
        %2536 = vmatmul.bf16.gmra.mxu0 %v2512
        %v2537 = vpop.f32.mrf.mxu0
        %v2538 = vadd.f32 0.0, %v2537
        %v2539 = vpop.f32.mrf.mxu0
        %v2540 = vadd.f32 0.0, %v2539
        %2541 = vmatmul.bf16.gmra.mxu0 %v2515
        %v2542 = vpop.f32.mrf.mxu0
        %v2543 = vadd.f32 0.0, %v2542
        %v2544 = vpop.f32.mrf.mxu0
        %v2545 = vadd.f32 0.0, %v2544
        %2546 = vmatmul.bf16.gmra.mxu0 %v2518
        %v2547 = vpop.f32.mrf.mxu0
        %v2548 = vadd.f32 0.0, %v2547
        %v2549 = vpop.f32.mrf.mxu0
        %v2550 = vadd.f32 0.0, %v2549
        %2551 = vdwg.mxu0
        %v2552 = vadd.f32 %v2347, %v2533
        %v2553 = vadd.f32 %v2349, %v2535
        %v2554 = vadd.f32 %v2352, %v2538
        %v2555 = vadd.f32 %v2354, %v2540
        %v2556 = vadd.f32 %v2357, %v2543
        %v2557 = vadd.f32 %v2359, %v2545
        %v2558 = vadd.f32 %v2362, %v2548
        %v2559 = vadd.f32 %v2364, %v2550
        %v2560 = vld [vmem:[%s1732] sm:$0xe]
        %v2561 = vld [vmem:[%s1732 + $0x8] sm:$0xe]
        %v2562 = vld [vmem:[%s1732 + $0x10] sm:$0xe]
        %v2563 = vld [vmem:[%s1732 + $0x18] sm:$0xe]
        %v2564 = vld [vmem:[%s1732 + $0x20] sm:$0xe]
        %v2565 = vld [vmem:[%s1732 + $0x28] sm:$0xe]
        %v2566 = vld [vmem:[%s1732 + $0x30] sm:$0xe]
        %v2567 = vld [vmem:[%s1732 + $0x38] sm:$0xe]
        %v2584 = vrot.slane %v2560, 5
        %v2585 = vrot.slane %v2584, 4
        %v2586 = vrot.slane %v2367, 5
        %v2587 = vsel %vm960, %v2585, %v2586
        %v2588 = vrot.slane %v2561, 5
        %v2589 = vrot.slane %v2588, 4
        %v2590 = vrot.slane %v2369, 5
        %v2591 = vsel %vm960, %v2589, %v2590
        %v2592 = vrot.slane %v2562, 5
        %v2593 = vrot.slane %v2592, 4
        %v2594 = vrot.slane %v2371, 5
        %v2595 = vsel %vm960, %v2593, %v2594
        %v2596 = vrot.slane %v2563, 5
        %v2597 = vrot.slane %v2596, 4
        %v2598 = vrot.slane %v2373, 5
        %v2599 = vsel %vm960, %v2597, %v2598
        %v2600 = vrot.slane %v2564, 5
        %v2601 = vrot.slane %v2600, 4
        %v2602 = vrot.slane %v2375, 5
        %v2603 = vsel %vm960, %v2601, %v2602
        %v2604 = vrot.slane %v2565, 5
        %v2605 = vrot.slane %v2604, 4
        %v2606 = vrot.slane %v2377, 5
        %v2607 = vsel %vm960, %v2605, %v2606
        %v2608 = vrot.slane %v2566, 5
        %v2609 = vrot.slane %v2608, 4
        %v2610 = vrot.slane %v2379, 5
        %v2611 = vsel %vm960, %v2609, %v2610
        %v2612 = vrot.slane %v2567, 5
        %v2613 = vrot.slane %v2612, 4
        %v2614 = vrot.slane %v2381, 5
        %v2615 = vsel %vm960, %v2613, %v2614
        %s2616 = scalar_lea.vmem %s1, 60
        %v2617 = vld [vmem:[%s2616] sm:$0xf]
        %v2618 = vunpack.c.l.b16 %v2587
        %v2619 = vunpack.c.l.b16 %v2591
        %v2620 = vunpack.c.l.b16 %v2595
        %v2621 = vunpack.c.l.b16 %v2599
        %v2622 = vunpack.c.l.b16 %v2603
        %v2623 = vunpack.c.l.b16 %v2607
        %v2624 = vunpack.c.l.b16 %v2611
        %v2625 = vunpack.c.l.b16 %v2615
        %v2626 = vpack.c.b16 %v2619, %v2618
        %v2627 = vpack.c.b16 %v2621, %v2620
        %v2628 = vpack.c.b16 %v2623, %v2622
        %v2629 = vpack.c.b16 %v2625, %v2624
        %v2631 = vsel %vm360, %v2626, 0
        %v2634 = vsel %vm360, %v2627, 0
        %v2637 = vsel %vm360, %v2628, 0
        %v2640 = vsel %vm360, %v2629, 0
        %v2643 = vsel %vm373, %v2617, 0
        %2645 = vmatpush.bf16.msra.mxu0 0
        %2646 = vmatpush.bf16.msra.mxu0 0
        %2647 = vmatpush.bf16.msra.mxu0 0
        %2648 = vmatpush.bf16.msra.mxu0 0
        %2649 = vmatpush.bf16.msra.mxu0 0
        %2650 = vmatpush.bf16.msra.mxu0 0
        %2651 = vmatpush.bf16.msra.mxu0 0
        %2652 = vmatpush.bf16.msra.mxu0 %v2643
        %2653 = vmatmul.bf16.gmra.mxu0 %v2631
        %v2654 = vpop.f32.mrf.mxu0
        %v2655 = vadd.f32 0.0, %v2654
        %v2656 = vpop.f32.mrf.mxu0
        %v2657 = vadd.f32 0.0, %v2656
        %2658 = vmatmul.bf16.gmra.mxu0 %v2634
        %v2659 = vpop.f32.mrf.mxu0
        %v2660 = vadd.f32 0.0, %v2659
        %v2661 = vpop.f32.mrf.mxu0
        %v2662 = vadd.f32 0.0, %v2661
        %2663 = vmatmul.bf16.gmra.mxu0 %v2637
        %v2664 = vpop.f32.mrf.mxu0
        %v2665 = vadd.f32 0.0, %v2664
        %v2666 = vpop.f32.mrf.mxu0
        %v2667 = vadd.f32 0.0, %v2666
        %2668 = vmatmul.bf16.gmra.mxu0 %v2640
        %v2669 = vpop.f32.mrf.mxu0
        %v2670 = vadd.f32 0.0, %v2669
        %v2671 = vpop.f32.mrf.mxu0
        %v2672 = vadd.f32 0.0, %v2671
        %2673 = vdwg.mxu0
        %v2674 = vadd.f32 %v2552, %v2655
        %v2675 = vadd.f32 %v2553, %v2657
        %v2676 = vadd.f32 %v2554, %v2660
        %v2677 = vadd.f32 %v2555, %v2662
        %v2678 = vadd.f32 %v2556, %v2665
        %v2679 = vadd.f32 %v2557, %v2667
        %v2680 = vadd.f32 %v2558, %v2670
        %v2681 = vadd.f32 %v2559, %v2672
        %v2682 = vpack.c.bf16 %v2674, %v2674
        %v2683 = vpack.c.bf16 %v2675, %v2675
        %v2684 = vpack.c.bf16 %v2676, %v2676
        %v2685 = vpack.c.bf16 %v2677, %v2677
        %v2686 = vpack.c.bf16 %v2678, %v2678
        %v2687 = vpack.c.bf16 %v2679, %v2679
        %v2688 = vpack.c.bf16 %v2680, %v2680
        %v2689 = vpack.c.bf16 %v2681, %v2681
        %s2690 = scalar_lea.vmem %s187, 96 [#allocation2]
        %2691 = vst.msk [vmem:[%s2690] sm:$0xf] %vm755, %v2682
        %2692 = vst.msk [vmem:[%s2690 + $0x4] sm:$0xf] %vm755, %v2683
        %2693 = vst.msk [vmem:[%s2690 + $0x8] sm:$0xf] %vm755, %v2684
        %2694 = vst.msk [vmem:[%s2690 + $0xc] sm:$0xf] %vm755, %v2685
        %2695 = vst.msk [vmem:[%s2690 + $0x10] sm:$0xf] %vm755, %v2686
        %2696 = vst.msk [vmem:[%s2690 + $0x14] sm:$0xf] %vm755, %v2687
        %2697 = vst.msk [vmem:[%s2690 + $0x18] sm:$0xf] %vm755, %v2688
        %2698 = vst.msk [vmem:[%s2690 + $0x1c] sm:$0xf] %vm755, %v2689
        %v2699 = vsel %vm360, %v2674, 0.0
        %v2700 = vsel %vm360, %v2675, 0.0
        %v2701 = vadd.f32 %v2699, %v2700
        %v2702 = vsel %vm360, %v2676, 0.0
        %v2703 = vadd.f32 %v2701, %v2702
        %v2704 = vsel %vm360, %v2677, 0.0
        %v2705 = vadd.f32 %v2703, %v2704
        %v2706 = vsel %vm360, %v2678, 0.0
        %v2707 = vadd.f32 %v2705, %v2706
        %v2708 = vsel %vm360, %v2679, 0.0
        %v2709 = vadd.f32 %v2707, %v2708
        %v2710 = vsel %vm360, %v2680, 0.0
        %v2711 = vadd.f32 %v2709, %v2710
        %v2712 = vsel %vm360, %v2681, 0.0
        %v2713 = vadd.f32 %v2711, %v2712
        %v2714 = vadd.f32 %v2041, %v2713
        %v2715 = vmul.f32 %v2674, %v2674
        %v2716 = vmul.f32 %v2675, %v2675
        %v2717 = vmul.f32 %v2676, %v2676
        %v2718 = vmul.f32 %v2677, %v2677
        %v2719 = vmul.f32 %v2678, %v2678
        %v2720 = vmul.f32 %v2679, %v2679
        %v2721 = vmul.f32 %v2680, %v2680
        %v2722 = vmul.f32 %v2681, %v2681
        %v2723 = vsel %vm360, %v2715, 0.0
        %v2724 = vsel %vm360, %v2716, 0.0
        %v2725 = vadd.f32 %v2723, %v2724
        %v2726 = vsel %vm360, %v2717, 0.0
        %v2727 = vadd.f32 %v2725, %v2726
        %v2728 = vsel %vm360, %v2718, 0.0
        %v2729 = vadd.f32 %v2727, %v2728
        %v2730 = vsel %vm360, %v2719, 0.0
        %v2731 = vadd.f32 %v2729, %v2730
        %v2732 = vsel %vm360, %v2720, 0.0
        %v2733 = vadd.f32 %v2731, %v2732
        %v2734 = vsel %vm360, %v2721, 0.0
        %v2735 = vadd.f32 %v2733, %v2734
        %v2736 = vsel %vm360, %v2722, 0.0
        %v2737 = vadd.f32 %v2735, %v2736
        %v2738 = vadd.f32 %v2065, %v2737
        %2739 = vst.msk [vmem:[%s208] sm:$0xff] %vm360, %v2714
        %2740 = vst.msk [vmem:[%s212] sm:$0xff] %vm360, %v2738
        %s2741 = sand.u32 %s71, 1
        %s2742 = sand.u32 %s71, 1
        %s2743 = smul.addr %s2742, 128
        %s2744 = scalar_lea.vmem [#allocation2], %s2743
        %p2745 = scmp.lt.s32.totalorder %s16, 1
        %s2746 = scalar_select %p2745, %s16, 1
        %s2747 = smul.addr %s2746, 8
        %s2748 = scalar_lea.vmem %s3, %s2747
        %p2749 = scmp.lt.s32.totalorder %s16, 1
        %s2750 = scalar_select %p2749, %s16, 1
        %s2751 = smul.addr %s2750, 8
        %s2752 = scalar_lea.vmem %s4, %s2751
        // Predicated region
        $region29: #{unet_up_forward.1} parent=27 // pred_check
          %p2753 = pneg %p81
        $region30: #{unet_up_forward.1} parent=27 // pred_check_branch
          %2755 = sbr.rel (%p2753) target = $region32
        $region31: #{unet_up_forward.1} parent=27 // pred_region
          %s2756 = smul.addr %s16, 8
          %s2757 = smul.addr %s2756, 4
          %s2758 = scalar_lea.vmem %s2, %s2757
          // Predicated region
          $region33: #{unet_up_forward.1} parent=31 // pred_check
            _
          $region34: #{unet_up_forward.1} parent=31 // pred_check_branch
            %2760 = sbr.rel (0) target = $region36
          $region35: #{unet_up_forward.1} parent=31 // pred_region
            // Predicated region
            $region37: #{unet_up_forward.1} parent=35 // pred_check
              _
            $region38: #{unet_up_forward.1} parent=35 // pred_check_branch
              %2762 = sbr.rel target = $region40
            $region39: #{unet_up_forward.1} parent=35 // pred_region
              // Predicated region
              $region52: #{unet_up_forward.1} parent=39 // pred_check
                _
              $region53: #{unet_up_forward.1} parent=39 // pred_check_branch
                %2840 = sbr.rel (0) target = $region55
              $region54: #{unet_up_forward.1} parent=39 // pred_region
                loop: start=0, step=1, limit=1
                $region56: #{unet_up_forward.1} parent=54 // loop_pre_header
                  _
                $region57: #{unet_up_forward.1} parent=54 // loop_header
                  %s2842 = sphi 0, %s2846
                  %p2843 = scmp.ge.s32.totalorder %s2842, 1
                  %s2847 = sphi %s2744, %s2744
                  %s2848 = sphi %s2758, %s2758
                $region58: #{unet_up_forward.1} parent=54 // loop_header_branch
                  %2845 = sbr.rel (%p2843) target = $region62
                $region59: #{unet_up_forward.1} parent=54 // loop_body
                  _
                $region60: #{unet_up_forward.1} parent=54 // loop_footer
                  %s2846 = sadd.s32 1, %s2842
                $region61: #{unet_up_forward.1} parent=54 // loop_footer_branch
                  %2841 = sbr.rel target = $region57
                $region62: #{unet_up_forward.1} parent=54 // loop_exit
                  _
                %s2850 = ssub.s32 16, 1
                loop: start=0, step=1, limit=1
                $region63: #{unet_up_forward.1} parent=54 // loop_pre_header
                  _
                $region64: #{unet_up_forward.1} parent=54 // loop_header
                  %s2852 = sphi 0, %s2856
                  %p2853 = scmp.ge.s32.totalorder %s2852, 1
                  %s2857 = sphi %s2744, %s2744
                  %s2858 = sphi %s2758, %s2758
                $region65: #{unet_up_forward.1} parent=54 // loop_header_branch
                  %2855 = sbr.rel (%p2853) target = $region69
                $region66: #{unet_up_forward.1} parent=54 // loop_body
                  %v2859 = vld [vmem:[%s2857] sm:%s2850]
                  %2860 = vst [vmem:[%s2858] sm:%s2850] %v2859
                  %v2861 = vld [vmem:[%s2857 + $0x4] sm:%s2850]
                  %2862 = vst [vmem:[%s2858 + $0x4] sm:%s2850] %v2861
                  %v2863 = vld [vmem:[%s2857 + $0x8] sm:%s2850]
                  %2864 = vst [vmem:[%s2858 + $0x8] sm:%s2850] %v2863
                  %v2865 = vld [vmem:[%s2857 + $0xc] sm:%s2850]
                  %2866 = vst [vmem:[%s2858 + $0xc] sm:%s2850] %v2865
                  %v2867 = vld [vmem:[%s2857 + $0x10] sm:%s2850]
                  %2868 = vst [vmem:[%s2858 + $0x10] sm:%s2850] %v2867
                  %v2869 = vld [vmem:[%s2857 + $0x14] sm:%s2850]
                  %2870 = vst [vmem:[%s2858 + $0x14] sm:%s2850] %v2869
                  %v2871 = vld [vmem:[%s2857 + $0x18] sm:%s2850]
                  %2872 = vst [vmem:[%s2858 + $0x18] sm:%s2850] %v2871
                  %v2873 = vld [vmem:[%s2857 + $0x1c] sm:%s2850]
                  %2874 = vst [vmem:[%s2858 + $0x1c] sm:%s2850] %v2873
                  %v2875 = vld [vmem:[%s2857 + $0x20] sm:%s2850]
                  %2876 = vst [vmem:[%s2858 + $0x40] sm:%s2850] %v2875
                  %v2877 = vld [vmem:[%s2857 + $0x24] sm:%s2850]
                  %2878 = vst [vmem:[%s2858 + $0x44] sm:%s2850] %v2877
                  %v2879 = vld [vmem:[%s2857 + $0x28] sm:%s2850]
                  %2880 = vst [vmem:[%s2858 + $0x48] sm:%s2850] %v2879
                  %v2881 = vld [vmem:[%s2857 + $0x2c] sm:%s2850]
                  %2882 = vst [vmem:[%s2858 + $0x4c] sm:%s2850] %v2881
                  %v2883 = vld [vmem:[%s2857 + $0x30] sm:%s2850]
                  %2884 = vst [vmem:[%s2858 + $0x50] sm:%s2850] %v2883
                  %v2885 = vld [vmem:[%s2857 + $0x34] sm:%s2850]
                  %2886 = vst [vmem:[%s2858 + $0x54] sm:%s2850] %v2885
                  %v2887 = vld [vmem:[%s2857 + $0x38] sm:%s2850]
                  %2888 = vst [vmem:[%s2858 + $0x58] sm:%s2850] %v2887
                  %v2889 = vld [vmem:[%s2857 + $0x3c] sm:%s2850]
                  %2890 = vst [vmem:[%s2858 + $0x5c] sm:%s2850] %v2889
                  %v2891 = vld [vmem:[%s2857 + $0x40] sm:%s2850]
                  %2892 = vst [vmem:[%s2858 + $0x80] sm:%s2850] %v2891
                  %v2893 = vld [vmem:[%s2857 + $0x44] sm:%s2850]
                  %2894 = vst [vmem:[%s2858 + $0x84] sm:%s2850] %v2893
                  %v2895 = vld [vmem:[%s2857 + $0x48] sm:%s2850]
                  %2896 = vst [vmem:[%s2858 + $0x88] sm:%s2850] %v2895
                  %v2897 = vld [vmem:[%s2857 + $0x4c] sm:%s2850]
                  %2898 = vst [vmem:[%s2858 + $0x8c] sm:%s2850] %v2897
                  %v2899 = vld [vmem:[%s2857 + $0x50] sm:%s2850]
                  %2900 = vst [vmem:[%s2858 + $0x90] sm:%s2850] %v2899
                  %v2901 = vld [vmem:[%s2857 + $0x54] sm:%s2850]
                  %2902 = vst [vmem:[%s2858 + $0x94] sm:%s2850] %v2901
                  %v2903 = vld [vmem:[%s2857 + $0x58] sm:%s2850]
                  %2904 = vst [vmem:[%s2858 + $0x98] sm:%s2850] %v2903
                  %v2905 = vld [vmem:[%s2857 + $0x5c] sm:%s2850]
                  %2906 = vst [vmem:[%s2858 + $0x9c] sm:%s2850] %v2905
                  %v2907 = vld [vmem:[%s2857 + $0x60] sm:%s2850]
                  %2908 = vst [vmem:[%s2858 + $0xc0] sm:%s2850] %v2907
                  %v2909 = vld [vmem:[%s2857 + $0x64] sm:%s2850]
                  %2910 = vst [vmem:[%s2858 + $0xc4] sm:%s2850] %v2909
                  %v2911 = vld [vmem:[%s2857 + $0x68] sm:%s2850]
                  %2912 = vst [vmem:[%s2858 + $0xc8] sm:%s2850] %v2911
                  %v2913 = vld [vmem:[%s2857 + $0x6c] sm:%s2850]
                  %2914 = vst [vmem:[%s2858 + $0xcc] sm:%s2850] %v2913
                  %v2915 = vld [vmem:[%s2857 + $0x70] sm:%s2850]
                  %2916 = vst [vmem:[%s2858 + $0xd0] sm:%s2850] %v2915
                  %v2917 = vld [vmem:[%s2857 + $0x74] sm:%s2850]
                  %2918 = vst [vmem:[%s2858 + $0xd4] sm:%s2850] %v2917
                  %v2919 = vld [vmem:[%s2857 + $0x78] sm:%s2850]
                  %2920 = vst [vmem:[%s2858 + $0xd8] sm:%s2850] %v2919
                  %v2921 = vld [vmem:[%s2857 + $0x7c] sm:%s2850]
                  %2922 = vst [vmem:[%s2858 + $0xdc] sm:%s2850] %v2921
                $region67: #{unet_up_forward.1} parent=54 // loop_footer
                  %s2856 = sadd.s32 1, %s2852
                $region68: #{unet_up_forward.1} parent=54 // loop_footer_branch
                  %2851 = sbr.rel target = $region64
                $region69: #{unet_up_forward.1} parent=54 // loop_exit
                  _
              $region55: #{unet_up_forward.1} parent=39 // pred_fallthru
                _
            $region40: #{unet_up_forward.1} parent=35 // pred_fallthru
              _
            // Predicated region
            $region41: #{unet_up_forward.1} parent=35 // pred_check
              _
            $region42: #{unet_up_forward.1} parent=35 // pred_check_branch
              %2764 = sbr.rel (0) target = $region44
            $region43: #{unet_up_forward.1} parent=35 // pred_region
              %s2766 = ssub.s32 16, 1
              loop: start=0, step=1, limit=1
              $region45: #{unet_up_forward.1} parent=43 // loop_pre_header
                _
              $region46: #{unet_up_forward.1} parent=43 // loop_header
                %s2768 = sphi 0, %s2772
                %p2769 = scmp.ge.s32.totalorder %s2768, 1
                %s2773 = sphi %s2744, %s2744
                %s2774 = sphi %s2758, %s2758
              $region47: #{unet_up_forward.1} parent=43 // loop_header_branch
                %2771 = sbr.rel (%p2769) target = $region51
              $region48: #{unet_up_forward.1} parent=43 // loop_body
                %v2775 = vld [vmem:[%s2773] sm:%s2766]
                %2776 = vst [vmem:[%s2774] sm:%s2766] %v2775
                %v2777 = vld [vmem:[%s2773 + $0x4] sm:%s2766]
                %2778 = vst [vmem:[%s2774 + $0x4] sm:%s2766] %v2777
                %v2779 = vld [vmem:[%s2773 + $0x8] sm:%s2766]
                %2780 = vst [vmem:[%s2774 + $0x8] sm:%s2766] %v2779
                %v2781 = vld [vmem:[%s2773 + $0xc] sm:%s2766]
                %2782 = vst [vmem:[%s2774 + $0xc] sm:%s2766] %v2781
                %v2783 = vld [vmem:[%s2773 + $0x10] sm:%s2766]
                %2784 = vst [vmem:[%s2774 + $0x10] sm:%s2766] %v2783
                %v2785 = vld [vmem:[%s2773 + $0x14] sm:%s2766]
                %2786 = vst [vmem:[%s2774 + $0x14] sm:%s2766] %v2785
                %v2787 = vld [vmem:[%s2773 + $0x18] sm:%s2766]
                %2788 = vst [vmem:[%s2774 + $0x18] sm:%s2766] %v2787
                %v2789 = vld [vmem:[%s2773 + $0x1c] sm:%s2766]
                %2790 = vst [vmem:[%s2774 + $0x1c] sm:%s2766] %v2789
                %v2791 = vld [vmem:[%s2773 + $0x20] sm:%s2766]
                %2792 = vst [vmem:[%s2774 + $0x40] sm:%s2766] %v2791
                %v2793 = vld [vmem:[%s2773 + $0x24] sm:%s2766]
                %2794 = vst [vmem:[%s2774 + $0x44] sm:%s2766] %v2793
                %v2795 = vld [vmem:[%s2773 + $0x28] sm:%s2766]
                %2796 = vst [vmem:[%s2774 + $0x48] sm:%s2766] %v2795
                %v2797 = vld [vmem:[%s2773 + $0x2c] sm:%s2766]
                %2798 = vst [vmem:[%s2774 + $0x4c] sm:%s2766] %v2797
                %v2799 = vld [vmem:[%s2773 + $0x30] sm:%s2766]
                %2800 = vst [vmem:[%s2774 + $0x50] sm:%s2766] %v2799
                %v2801 = vld [vmem:[%s2773 + $0x34] sm:%s2766]
                %2802 = vst [vmem:[%s2774 + $0x54] sm:%s2766] %v2801
                %v2803 = vld [vmem:[%s2773 + $0x38] sm:%s2766]
                %2804 = vst [vmem:[%s2774 + $0x58] sm:%s2766] %v2803
                %v2805 = vld [vmem:[%s2773 + $0x3c] sm:%s2766]
                %2806 = vst [vmem:[%s2774 + $0x5c] sm:%s2766] %v2805
                %v2807 = vld [vmem:[%s2773 + $0x40] sm:%s2766]
                %2808 = vst [vmem:[%s2774 + $0x80] sm:%s2766] %v2807
                %v2809 = vld [vmem:[%s2773 + $0x44] sm:%s2766]
                %2810 = vst [vmem:[%s2774 + $0x84] sm:%s2766] %v2809
                %v2811 = vld [vmem:[%s2773 + $0x48] sm:%s2766]
                %2812 = vst [vmem:[%s2774 + $0x88] sm:%s2766] %v2811
                %v2813 = vld [vmem:[%s2773 + $0x4c] sm:%s2766]
                %2814 = vst [vmem:[%s2774 + $0x8c] sm:%s2766] %v2813
                %v2815 = vld [vmem:[%s2773 + $0x50] sm:%s2766]
                %2816 = vst [vmem:[%s2774 + $0x90] sm:%s2766] %v2815
                %v2817 = vld [vmem:[%s2773 + $0x54] sm:%s2766]
                %2818 = vst [vmem:[%s2774 + $0x94] sm:%s2766] %v2817
                %v2819 = vld [vmem:[%s2773 + $0x58] sm:%s2766]
                %2820 = vst [vmem:[%s2774 + $0x98] sm:%s2766] %v2819
                %v2821 = vld [vmem:[%s2773 + $0x5c] sm:%s2766]
                %2822 = vst [vmem:[%s2774 + $0x9c] sm:%s2766] %v2821
                %v2823 = vld [vmem:[%s2773 + $0x60] sm:%s2766]
                %2824 = vst [vmem:[%s2774 + $0xc0] sm:%s2766] %v2823
                %v2825 = vld [vmem:[%s2773 + $0x64] sm:%s2766]
                %2826 = vst [vmem:[%s2774 + $0xc4] sm:%s2766] %v2825
                %v2827 = vld [vmem:[%s2773 + $0x68] sm:%s2766]
                %2828 = vst [vmem:[%s2774 + $0xc8] sm:%s2766] %v2827
                %v2829 = vld [vmem:[%s2773 + $0x6c] sm:%s2766]
                %2830 = vst [vmem:[%s2774 + $0xcc] sm:%s2766] %v2829
                %v2831 = vld [vmem:[%s2773 + $0x70] sm:%s2766]
                %2832 = vst [vmem:[%s2774 + $0xd0] sm:%s2766] %v2831
                %v2833 = vld [vmem:[%s2773 + $0x74] sm:%s2766]
                %2834 = vst [vmem:[%s2774 + $0xd4] sm:%s2766] %v2833
                %v2835 = vld [vmem:[%s2773 + $0x78] sm:%s2766]
                %2836 = vst [vmem:[%s2774 + $0xd8] sm:%s2766] %v2835
                %v2837 = vld [vmem:[%s2773 + $0x7c] sm:%s2766]
                %2838 = vst [vmem:[%s2774 + $0xdc] sm:%s2766] %v2837
              $region49: #{unet_up_forward.1} parent=43 // loop_footer
                %s2772 = sadd.s32 1, %s2768
              $region50: #{unet_up_forward.1} parent=43 // loop_footer_branch
                %2767 = sbr.rel target = $region46
              $region51: #{unet_up_forward.1} parent=43 // loop_exit
                _
            $region44: #{unet_up_forward.1} parent=35 // pred_fallthru
              _
          $region36: #{unet_up_forward.1} parent=31 // pred_fallthru
            _
          %2923 = vnop
        $region32: #{unet_up_forward.1} parent=27 // pred_fallthru
          _
        // Predicated region
        $region70: #{unet_up_forward.1} parent=27 // pred_check
          %p2924 = pneg %p107
        $region71: #{unet_up_forward.1} parent=27 // pred_check_branch
          %2926 = sbr.rel (%p2924) target = $region73
        $region72: #{unet_up_forward.1} parent=27 // pred_region
          _
        $region73: #{unet_up_forward.1} parent=27 // pred_fallthru
          _
        // Predicated region
        $region74: #{unet_up_forward.1} parent=27 // pred_check
          %p2927 = pneg %p133
        $region75: #{unet_up_forward.1} parent=27 // pred_check_branch
          %2929 = sbr.rel (%p2927) target = $region77
        $region76: #{unet_up_forward.1} parent=27 // pred_region
          _
        $region77: #{unet_up_forward.1} parent=27 // pred_fallthru
          _
      $region28: #{unet_up_forward.1} parent=5 // pred_fallthru
        _
      %p2930 = scmp.le.s32.totalorder 2, %s11
      // Predicated region
      $region78: #{unet_up_forward.1} parent=5 // pred_check
        %p2931 = pneg %p2930
      $region79: #{unet_up_forward.1} parent=5 // pred_check_branch
        %2933 = sbr.rel (%p2931) target = $region81
      $region80: #{unet_up_forward.1} parent=5 // pred_region
        %s2934 = ssub.s32 %s11, 2
        // Predicated region
        $region82: #{unet_up_forward.1} parent=80 // pred_check
          %p2935 = pneg %p87
        $region83: #{unet_up_forward.1} parent=80 // pred_check_branch
          %2937 = sbr.rel (%p2935) target = $region85
        $region84: #{unet_up_forward.1} parent=80 // pred_region
          %s2938 = sand.u32 %s72, 1
          %s2939 = sand.u32 %s72, 1
          %s2940 = smul.addr %s2939, 128
          %s2941 = scalar_lea.vmem [#allocation2], %s2940
        $region85: #{unet_up_forward.1} parent=80 // pred_fallthru
          _
        // Predicated region
        $region86: #{unet_up_forward.1} parent=80 // pred_check
          %p2942 = pneg %p113
        $region87: #{unet_up_forward.1} parent=80 // pred_check_branch
          %2944 = sbr.rel (%p2942) target = $region89
        $region88: #{unet_up_forward.1} parent=80 // pred_region
          %p2945 = scmp.lt.s32.totalorder %s17, 1
          %s2946 = scalar_select %p2945, %s17, 1
          %s2947 = smul.addr %s2946, 8
          %s2948 = scalar_lea.vmem %s3, %s2947
        $region89: #{unet_up_forward.1} parent=80 // pred_fallthru
          _
        // Predicated region
        $region90: #{unet_up_forward.1} parent=80 // pred_check
          %p2949 = pneg %p139
        $region91: #{unet_up_forward.1} parent=80 // pred_check_branch
          %2951 = sbr.rel (%p2949) target = $region93
        $region92: #{unet_up_forward.1} parent=80 // pred_region
          %p2952 = scmp.lt.s32.totalorder %s17, 1
          %s2953 = scalar_select %p2952, %s17, 1
          %s2954 = smul.addr %s2953, 8
          %s2955 = scalar_lea.vmem %s4, %s2954
        $region93: #{unet_up_forward.1} parent=80 // pred_fallthru
          _
      $region81: #{unet_up_forward.1} parent=5 // pred_fallthru
        _
    $region6: #{unet_up_forward.1} parent=1 // loop_footer
      %s15 = sadd.s32 1, %s11
    $region7: #{unet_up_forward.1} parent=1 // loop_footer_branch
      %10 = sbr.rel target = $region3
    $region8: #{unet_up_forward.1} parent=1 // loop_exit
      _

</llo_original>
